<compile_context>
chip_gen: v7x
topology: tpu7x:2x2x1
jax: 0.10.0
libtpu: 0.0.40
codegen_flags: <defaults>
</compile_context>

<pallas_src>
import functools

import jax
import jax.numpy as jnp
from jax.experimental import pallas as pl
from jax.experimental.pallas import tpu as pltpu

MXU_DTYPE = jnp.bfloat16     # matmul operand dtype (f32 accumulation on MXU)
PROB_DTYPE = jnp.bfloat16    # dtype of the returned attention probabilities


def _vmem_capacity_bytes():
    try:
        return int(getattr(pltpu.get_tpu_info(), "vmem_capacity_bytes", 128 << 20))
    except Exception:
        return 128 << 20


def _vmem_limit(block_bytes):
    # Never below the largest per-generation default (32 MiB) so we only ever
    # relax the scoped limit; cap well under v7x's 64 MiB physical VMEM.
    return int(min(48 << 20, max(32 << 20, 3 * int(block_bytes))))


def _layer_norm(z, g, b):
    mu = jnp.mean(z, axis=-1, keepdims=True)
    var = jnp.mean(jnp.square(z - mu), axis=-1, keepdims=True)
    return (z - mu) * jax.lax.rsqrt(var + 1e-5) * g + b


# ---------------------------------------------------------------------------
# Kernel A: both attentions, one (batch, head) pair per grid step
# ---------------------------------------------------------------------------
def _attn_kernel(q_ref, kdt_ref, ket_ref, v_ref, tgtm_ref, srcm_ref,
                 adec_ref, aenc_ref, ctx_ref, *, inv_norm):
    q = q_ref[0, 0]                                        # (Lq, d_k) mxu dtype

    def masked_softmax(scores, mask_i8):
        # reference order: scores/norm, masked_fill(-1e9), softmax
        s = jnp.where(mask_i8 != 0, jnp.float32(-1e9), scores * inv_norm)
        p = jnp.exp(s - jnp.max(s, axis=-1, keepdims=True))
        # exact row normalization: the reciprocal is only (Lq,1) wide, so the
        # exact divide is cheap and keeps probs faithful up to PROB_DTYPE.
        return p * (1.0 / jnp.sum(p, axis=-1, keepdims=True))

    # Self-attention: probabilities only (output branch is dead in the ref).
    s_dec = jnp.dot(q, kdt_ref[0, 0], preferred_element_type=jnp.float32)
    adec_ref[0, 0] = masked_softmax(s_dec, tgtm_ref[0]).astype(adec_ref.dtype)

    # Cross-attention: probabilities + per-head context.
    s_enc = jnp.dot(q, ket_ref[0, 0], preferred_element_type=jnp.float32)
    p_enc = masked_softmax(s_enc, srcm_ref[0])
    aenc_ref[0, 0] = p_enc.astype(aenc_ref.dtype)
    ctx_ref[0, 0] = jnp.dot(p_enc.astype(q.dtype), v_ref[0, 0],
                            preferred_element_type=jnp.float32
                            ).astype(ctx_ref.dtype)


def _attention(dec_input, enc_output, tgt_mask, src_mask, *,
               n_head, mxu_dtype, prob_dtype):
    len_q, sz_b, d_model = dec_input.shape
    len_k = enc_output.shape[0]
    assert d_model % n_head == 0
    d_k = d_model // n_head

    # Head-split layouts (one fused XLA transpose each, layout plumbing only).
    # K sides are delivered pre-transposed so every in-kernel matmul is NN.
    dec4 = dec_input.reshape(len_q, sz_b, n_head, d_k)
    enc4 = enc_output.reshape(len_k, sz_b, n_head, d_k)
    q_h = jnp.transpose(dec4, (1, 2, 0, 3)).astype(mxu_dtype)    # (b,h,Lq,dk)
    kdt_h = jnp.transpose(dec4, (1, 2, 3, 0)).astype(mxu_dtype)  # (b,h,dk,Lq)
    ket_h = jnp.transpose(enc4, (1, 2, 3, 0)).astype(mxu_dtype)  # (b,h,dk,Lk)
    v_h = jnp.transpose(enc4, (1, 2, 0, 3)).astype(mxu_dtype)    # (b,h,Lk,dk)

    # Masks as int8: 4x less DMA than f32 and no repeat() materialization.
    tgt_i8 = (tgt_mask != 0).astype(jnp.int8)                    # (sz_b,Lq,Lq)
    src_i8 = (src_mask != 0).astype(jnp.int8)                    # (sz_b,Lq,Lk)

    # reference mask.repeat quirk: head h of batch b uses mask[(b*n_head+h)%sz_b]
    mask_idx = lambda b, h: ((b * n_head + h) % sz_b, 0, 0)
    per_head = lambda b, h: (b, h, 0, 0)

    esz = jnp.dtype(mxu_dtype).itemsize
    psz = jnp.dtype(prob_dtype).itemsize
    blk = (esz * (len_q * d_k + d_k * len_q + d_k * len_k + len_k * d_k)
           + (len_q * len_q + len_q * len_k)              # int8 mask blocks
           + psz * (len_q * len_q + len_q * len_k)        # prob output blocks
           + esz * len_q * d_k)                           # context block

    kernel = functools.partial(_attn_kernel, inv_norm=1.0 / float(d_k) ** 0.5)
    return pl.pallas_call(
        kernel,
        out_shape=(
            jax.ShapeDtypeStruct((sz_b, n_head, len_q, len_q), prob_dtype),
            jax.ShapeDtypeStruct((sz_b, n_head, len_q, len_k), prob_dtype),
            jax.ShapeDtypeStruct((sz_b, n_head, len_q, d_k), mxu_dtype)),
        grid=(sz_b, n_head),
        in_specs=[pl.BlockSpec((1, 1, len_q, d_k), per_head),
                  pl.BlockSpec((1, 1, d_k, len_q), per_head),
                  pl.BlockSpec((1, 1, d_k, len_k), per_head),
                  pl.BlockSpec((1, 1, len_k, d_k), per_head),
                  pl.BlockSpec((1, len_q, len_q), mask_idx),
                  pl.BlockSpec((1, len_q, len_k), mask_idx)],
        out_specs=(pl.BlockSpec((1, 1, len_q, len_q), per_head),
                   pl.BlockSpec((1, 1, len_q, len_k), per_head),
                   pl.BlockSpec((1, 1, len_q, d_k), per_head)),
        compiler_params=pltpu.CompilerParams(
            dimension_semantics=("parallel", "parallel"),
            vmem_limit_bytes=_vmem_limit(blk)),
    )(q_h, kdt_h, ket_h, v_h, tgt_i8, src_i8)


# ---------------------------------------------------------------------------
# Kernel B: fc+residual+LN+mask fused with CNNFeed+LN+mask, row-tiled
# ---------------------------------------------------------------------------
def _post_ffn_kernel(x_ref, res_ref, npm_ref,
                     fcw_ref, fcb_ref, g1_ref, be1_ref,
                     w1_ref, bb1_ref, w2_ref, bb2_ref, g2_ref, be2_ref,
                     o_ref, *, mxu_dtype):
    x = x_ref[...]
    npm = npm_ref[...]
    # MultiHeadAttention epilogue: fc -> +residual -> LayerNorm -> *non_pad_mask
    y = jnp.dot(x.astype(mxu_dtype), fcw_ref[...],
                preferred_element_type=jnp.float32) + fcb_ref[...]
    h_in = _layer_norm(y + res_ref[...], g1_ref[...], be1_ref[...]) * npm
    # CNNFeed: Conv1d(k=1) -> relu -> Conv1d(k=1) -> +residual -> LN, then *npm
    h = jnp.maximum(jnp.dot(h_in.astype(mxu_dtype), w1_ref[...],
                            preferred_element_type=jnp.float32) + bb1_ref[...],
                    0.0)
    y2 = jnp.dot(h.astype(mxu_dtype), w2_ref[...],
                 preferred_element_type=jnp.float32) + bb2_ref[...]
    o_ref[...] = _layer_norm(y2 + h_in, g2_ref[...], be2_ref[...]) * npm


def _row_tile(R, x_itemsize):
    # sublane alignment: bf16 rows pack 16 per sublane tile, f32 pack 8
    sub = 16 if x_itemsize < 4 else 8
    big_vmem = _vmem_capacity_bytes() >= (100 << 20)   # 128 MiB parts vs v7x 64
    if R >= 1024:
        return 512 if big_vmem else 256
    if R > 256:
        return 256
    # Small problem: split in two so a v7x megacore still sees 2 grid steps.
    half = (R + 1) // 2
    half = ((half + sub - 1) // sub) * sub
    return R if half >= R else half


def _post_ffn(x, res, npm, mha_p, ffn_p, *, mxu_dtype):
    R, D = x.shape
    H = ffn_p["w1t"].shape[1]
    TR = _row_tile(R, jnp.dtype(x.dtype).itemsize)
    Rp = pl.cdiv(R, TR) * TR
    if Rp != R:
        pad = ((0, Rp - R), (0, 0))
        x, res, npm = jnp.pad(x, pad), jnp.pad(res, pad), jnp.pad(npm, pad)

    esz = jnp.dtype(mxu_dtype).itemsize
    blk = (TR * D * (jnp.dtype(x.dtype).itemsize + 4 + 4) + TR * 4
           + (D * D + D * H + H * D) * esz + (5 * D + H) * 4)

    row = lambda i: (i, 0)
    rep = lambda i: (0, 0)
    kernel = functools.partial(_post_ffn_kernel, mxu_dtype=mxu_dtype)
    out = pl.pallas_call(
        kernel,
        out_shape=jax.ShapeDtypeStruct((Rp, D), jnp.float32),
        grid=(Rp // TR,),
        in_specs=[pl.BlockSpec((TR, D), row),
                  pl.BlockSpec((TR, D), row),
                  pl.BlockSpec((TR, 1), row),
                  # Weights / biases / LN params: constant index map -> stay
                  # VMEM-resident across row tiles.
                  # TODO(synk): pipeline_mode=pl.Buffered(1) on these would drop
                  # the redundant second weight buffer (extra headroom on v7x).
                  pl.BlockSpec((D, D), rep),
                  pl.BlockSpec((1, D), rep),
                  pl.BlockSpec((1, D), rep),
                  pl.BlockSpec((1, D), rep),
                  pl.BlockSpec((D, H), rep),
                  pl.BlockSpec((1, H), rep),
                  pl.BlockSpec((H, D), rep),
                  pl.BlockSpec((1, D), rep),
                  pl.BlockSpec((1, D), rep),
                  pl.BlockSpec((1, D), rep)],
        out_specs=pl.BlockSpec((TR, D), row),
        compiler_params=pltpu.CompilerParams(
            dimension_semantics=("parallel",),
            vmem_limit_bytes=_vmem_limit(blk)),
    )(x, res, npm,
      mha_p["fc_wt"].astype(mxu_dtype), mha_p["fc_b"], mha_p["ln_g"], mha_p["ln_b"],
      ffn_p["w1t"].astype(mxu_dtype), ffn_p["b1"],
      ffn_p["w2t"].astype(mxu_dtype), ffn_p["b2"],
      ffn_p["ln_g"], ffn_p["ln_b"])
    return out if Rp == R else out[:R]


# ---------------------------------------------------------------------------
# DecoderLayer forward
# ---------------------------------------------------------------------------
def decoder_layer(dec_input, enc_output, non_pad_mask,
                  slf_src_attn_mask, slf_tgt_attn_mask, params, n_head,
                  mxu_dtype=MXU_DTYPE, prob_dtype=PROB_DTYPE):
    len_q, sz_b, d_model = dec_input.shape
    len_k = enc_output.shape[0]
    d_k = d_model // n_head
    R = len_q * sz_b

    attn_dec4, attn_enc4, ctx = _attention(
        dec_input, enc_output, slf_tgt_attn_mask, slf_src_attn_mask,
        n_head=n_head, mxu_dtype=mxu_dtype, prob_dtype=prob_dtype)

    # Flat (b*n_head + h) ordering, as returned by the reference (free reshape).
    attn_dec = attn_dec4.reshape(sz_b * n_head, len_q, len_q)
    attn_enc = attn_enc4.reshape(sz_b * n_head, len_q, len_k)

    # Reference re-interleave: output.view(n_head, sz_b, len_q, d_k)
    #   .permute(1,2,0,3).view(sz_b, len_q, d_model), then fc, transpose(0,1).
    # ctx's leading (sz_b, n_head) flattens to b*n_head+h, so .view is a free
    # reshape; one fused bf16 XLA transpose builds the (len_q*sz_b)-row slab.
    viewed = ctx.reshape(n_head, sz_b, len_q, d_k)
    x_rows = jnp.transpose(viewed, (2, 1, 0, 3)).reshape(R, d_model)

    res_rows = dec_input.reshape(R, d_model)
    npm_rows = non_pad_mask.reshape(R, 1).astype(jnp.float32)

    # NOTE: params["slf_attn"] fc/LayerNorm are intentionally unused — the
    # reference discards the self-attention output (dead path).
    out_rows = _post_ffn(x_rows, res_rows, npm_rows,
                         params["slf_src_attn"], params["pos_ffn"],
                         mxu_dtype=mxu_dtype)
    return out_rows.reshape(len_q, sz_b, d_model), attn_dec, attn_enc


def init_params(key, d_model, d_inner):
    ks = jax.random.split(key, 8)

    def mha_p(kw, kb):
        return {
            "fc_wt": jax.random.normal(kw, (d_model, d_model), jnp.float32)
                     * (2.0 / (2 * d_model)) ** 0.5,        # xavier_normal-like
            "fc_b": jax.random.normal(kb, (1, d_model), jnp.float32) * 0.01,
            "ln_g": jnp.ones((1, d_model), jnp.float32),
            "ln_b": jnp.zeros((1, d_model), jnp.float32),
        }

    w1 = jax.random.normal(ks[4], (d_inner, d_model), jnp.float32) * (1.0 / d_model) ** 0.5
    w2 = jax.random.normal(ks[5], (d_model, d_inner), jnp.float32) * (1.0 / d_inner) ** 0.5
    return {
        "slf_attn": mha_p(ks[0], ks[1]),      # present for parity; unused (dead path)
        "slf_src_attn": mha_p(ks[2], ks[3]),
        "pos_ffn": {
            "w1t": w1.T,
            "b1": jax.random.normal(ks[6], (1, d_inner), jnp.float32) * 0.01,
            "w2t": w2.T,
            "b2": jax.random.normal(ks[7], (1, d_model), jnp.float32) * 0.01,
            "ln_g": jnp.ones((1, d_model), jnp.float32),
            "ln_b": jnp.zeros((1, d_model), jnp.float32),
        },
    }


if __name__ == "__main__":
    # NOTE: small shapes for the smoke test; performance conclusions require
    # lane dims (len_q, len_k, d_k) >= 128.
    len_q, len_k, sz_b = 8, 8, 2
    d_model, d_inner, n_head = 32, 64, 4

    key = jax.random.PRNGKey(0)
    k_dec, k_enc, k_par = jax.random.split(key, 3)

    dec_input = jax.random.normal(k_dec, (len_q, sz_b, d_model), jnp.float32)
    enc_output = jax.random.normal(k_enc, (len_k, sz_b, d_model), jnp.float32)

    # non_pad_mask: (len_q, sz_b, 1), zero out last two positions of batch 0
    non_pad_mask = jnp.ones((len_q, sz_b, 1), jnp.float32).at[-2:, 0, 0].set(0.0)
    # causal target mask (True == masked), passed as bool (no f32 mask traffic)
    causal = jnp.triu(jnp.ones((len_q, len_q), jnp.int32), k=1) > 0
    slf_tgt_attn_mask = jnp.tile(causal[None], (sz_b, 1, 1))
    # source mask: mask the last encoder position
    slf_src_attn_mask = jnp.zeros((sz_b, len_q, len_k), jnp.bool_).at[:, :, -1].set(True)

    params = init_params(k_par, d_model, d_inner)

    fwd = jax.jit(functools.partial(decoder_layer, n_head=n_head))
    dec_out, attn_dec, attn_enc = fwd(dec_input, enc_output, non_pad_mask,
                                      slf_src_attn_mask, slf_tgt_attn_mask, params)
    jax.block_until_ready((dec_out, attn_dec, attn_enc))

    assert dec_out.shape == (len_q, sz_b, d_model)
    assert attn_dec.shape == (n_head * sz_b, len_q, len_q)
    assert attn_enc.shape == (n_head * sz_b, len_q, len_k)
    assert bool(jnp.isfinite(dec_out).all())
    assert bool(jnp.isfinite(attn_dec.astype(jnp.float32)).all())
    assert bool(jnp.isfinite(attn_enc.astype(jnp.float32)).all())
    # attention rows must sum to ~1 over unmasked keys
    assert bool(jnp.allclose(jnp.sum(attn_enc.astype(jnp.float32), -1), 1.0, atol=2e-2))
    print("KERNEL_OK")
</pallas_src>

<mosaic_0001>
module attributes {stable_mosaic.version = 11 : i64} {
  func.func @_attn_kernel(%arg0: i32, %arg1: i32, %arg2: memref<1x1x8x8xbf16, #tpu.memory_space<vmem>>, %arg3: memref<1x1x8x8xbf16, #tpu.memory_space<vmem>>, %arg4: memref<1x1x8x8xbf16, #tpu.memory_space<vmem>>, %arg5: memref<1x1x8x8xbf16, #tpu.memory_space<vmem>>, %arg6: memref<1x8x8xi8, #tpu.memory_space<vmem>>, %arg7: memref<1x8x8xi8, #tpu.memory_space<vmem>>, %arg8: memref<1x1x8x8xbf16, #tpu.memory_space<vmem>>, %arg9: memref<1x1x8x8xbf16, #tpu.memory_space<vmem>>, %arg10: memref<1x1x8x8xbf16, #tpu.memory_space<vmem>>) attributes {dimension_semantics = [#tpu.dimension_semantics<parallel>, #tpu.dimension_semantics<parallel>], iteration_bounds = array<i64: 2, 4>, scalar_prefetch = 0 : i64, scratch_operands = 0 : i64, tpu.core_type = #tpu.core_type<tc>, window_params = [{transform_indices = @transform_0, window_bounds = array<i64: 1, 1, 8, 8>}, {transform_indices = @transform_1, window_bounds = array<i64: 1, 1, 8, 8>}, {transform_indices = @transform_2, window_bounds = array<i64: 1, 1, 8, 8>}, {transform_indices = @transform_3, window_bounds = array<i64: 1, 1, 8, 8>}, {transform_indices = @transform_4, window_bounds = array<i64: 1, 8, 8>}, {transform_indices = @transform_5, window_bounds = array<i64: 1, 8, 8>}, {transform_indices = @transform_6, window_bounds = array<i64: 1, 1, 8, 8>}, {transform_indices = @transform_7, window_bounds = array<i64: 1, 1, 8, 8>}, {transform_indices = @transform_8, window_bounds = array<i64: 1, 1, 8, 8>}]} {
    %c0 = arith.constant 0 : index
    %c0_0 = arith.constant 0 : index
    %c0_1 = arith.constant 0 : index
    %c0_2 = arith.constant 0 : index
    %0 = vector.load %arg2[%c0, %c0_0, %c0_1, %c0_2] : memref<1x1x8x8xbf16, #tpu.memory_space<vmem>>, vector<1x1x8x8xbf16>
    %1 = vector.shape_cast %0 : vector<1x1x8x8xbf16> to vector<8x8xbf16>
    %c0_3 = arith.constant 0 : index
    %c0_4 = arith.constant 0 : index
    %c0_5 = arith.constant 0 : index
    %c0_6 = arith.constant 0 : index
    %2 = vector.load %arg3[%c0_3, %c0_4, %c0_5, %c0_6] : memref<1x1x8x8xbf16, #tpu.memory_space<vmem>>, vector<1x1x8x8xbf16>
    %3 = vector.shape_cast %2 : vector<1x1x8x8xbf16> to vector<8x8xbf16>
    %cst = arith.constant dense<0.000000e+00> : vector<8x8xf32>
    %4 = tpu.matmul %1, %3, %cst {dimension_numbers = #tpu.dot_dimension_numbers<[1], [0], [0], [1], [0, 0, 1, 1], [], []>} : vector<8x8xbf16>, vector<8x8xbf16>, vector<8x8xf32> -> vector<8x8xf32>
    %c0_7 = arith.constant 0 : index
    %c0_8 = arith.constant 0 : index
    %c0_9 = arith.constant 0 : index
    %5 = vector.load %arg6[%c0_7, %c0_8, %c0_9] : memref<1x8x8xi8, #tpu.memory_space<vmem>>, vector<1x8x8xi8>
    %6 = vector.shape_cast %5 : vector<1x8x8xi8> to vector<8x8xi8>
    %c0_i8 = arith.constant 0 : i8
    %7 = vector.broadcast %c0_i8 : i8 to vector<8x8xi8>
    %8 = arith.cmpi ne, %6, %7 : vector<8x8xi8>
    %cst_10 = arith.constant 0.353553385 : f32
    %9 = vector.broadcast %cst_10 : f32 to vector<8x8xf32>
    %10 = arith.mulf %4, %9 : vector<8x8xf32>
    %cst_11 = arith.constant -1.000000e+09 : f32
    %11 = vector.broadcast %cst_11 : f32 to vector<8x8xf32>
    %12 = arith.select %8, %11, %10 : vector<8x8xi1>, vector<8x8xf32>
    %cst_12 = arith.constant dense<0xFF800000> : vector<8xf32>
    %13 = vector.multi_reduction <maximumf>, %12, %cst_12 [1] : vector<8x8xf32> to vector<8xf32>
    %14 = vector.shape_cast %13 : vector<8xf32> to vector<8x1xf32>
    %15 = vector.broadcast %14 : vector<8x1xf32> to vector<8x8xf32>
    %16 = arith.subf %12, %15 : vector<8x8xf32>
    %17 = math.exp %16 : vector<8x8xf32>
    %cst_13 = arith.constant dense<0.000000e+00> : vector<8xf32>
    %18 = vector.multi_reduction <add>, %17, %cst_13 [1] : vector<8x8xf32> to vector<8xf32>
    %19 = vector.shape_cast %18 : vector<8xf32> to vector<8x1xf32>
    %cst_14 = arith.constant 1.000000e+00 : f32
    %20 = vector.broadcast %cst_14 : f32 to vector<8x1xf32>
    %21 = arith.divf %20, %19 : vector<8x1xf32>
    %22 = vector.broadcast %21 : vector<8x1xf32> to vector<8x8xf32>
    %23 = arith.mulf %17, %22 : vector<8x8xf32>
    %24 = arith.truncf %23 : vector<8x8xf32> to vector<8x8xbf16>
    %c0_15 = arith.constant 0 : index
    %c0_16 = arith.constant 0 : index
    %c0_17 = arith.constant 0 : index
    %c0_18 = arith.constant 0 : index
    %25 = vector.load %arg8[%c0_15, %c0_16, %c0_17, %c0_18] : memref<1x1x8x8xbf16, #tpu.memory_space<vmem>>, vector<1x1x8x8xbf16>
    %26 = vector.shape_cast %25 : vector<1x1x8x8xbf16> to vector<8x8xbf16>
    %27 = vector.shape_cast %24 : vector<8x8xbf16> to vector<1x1x8x8xbf16>
    tpu.vector_store %arg8[%c0_15, %c0_16, %c0_17, %c0_18], %27 {strides = array<i32>} : memref<1x1x8x8xbf16, #tpu.memory_space<vmem>>, vector<1x1x8x8xbf16>,
    %c0_19 = arith.constant 0 : index
    %c0_20 = arith.constant 0 : index
    %c0_21 = arith.constant 0 : index
    %c0_22 = arith.constant 0 : index
    %28 = vector.load %arg4[%c0_19, %c0_20, %c0_21, %c0_22] : memref<1x1x8x8xbf16, #tpu.memory_space<vmem>>, vector<1x1x8x8xbf16>
    %29 = vector.shape_cast %28 : vector<1x1x8x8xbf16> to vector<8x8xbf16>
    %cst_23 = arith.constant dense<0.000000e+00> : vector<8x8xf32>
    %30 = tpu.matmul %1, %29, %cst_23 {dimension_numbers = #tpu.dot_dimension_numbers<[1], [0], [0], [1], [0, 0, 1, 1], [], []>} : vector<8x8xbf16>, vector<8x8xbf16>, vector<8x8xf32> -> vector<8x8xf32>
    %c0_24 = arith.constant 0 : index
    %c0_25 = arith.constant 0 : index
    %c0_26 = arith.constant 0 : index
    %31 = vector.load %arg7[%c0_24, %c0_25, %c0_26] : memref<1x8x8xi8, #tpu.memory_space<vmem>>, vector<1x8x8xi8>
    %32 = vector.shape_cast %31 : vector<1x8x8xi8> to vector<8x8xi8>
    %c0_i8_27 = arith.constant 0 : i8
    %33 = vector.broadcast %c0_i8_27 : i8 to vector<8x8xi8>
    %34 = arith.cmpi ne, %32, %33 : vector<8x8xi8>
    %cst_28 = arith.constant 0.353553385 : f32
    %35 = vector.broadcast %cst_28 : f32 to vector<8x8xf32>
    %36 = arith.mulf %30, %35 : vector<8x8xf32>
    %cst_29 = arith.constant -1.000000e+09 : f32
    %37 = vector.broadcast %cst_29 : f32 to vector<8x8xf32>
    %38 = arith.select %34, %37, %36 : vector<8x8xi1>, vector<8x8xf32>
    %cst_30 = arith.constant dense<0xFF800000> : vector<8xf32>
    %39 = vector.multi_reduction <maximumf>, %38, %cst_30 [1] : vector<8x8xf32> to vector<8xf32>
    %40 = vector.shape_cast %39 : vector<8xf32> to vector<8x1xf32>
    %41 = vector.broadcast %40 : vector<8x1xf32> to vector<8x8xf32>
    %42 = arith.subf %38, %41 : vector<8x8xf32>
    %43 = math.exp %42 : vector<8x8xf32>
    %cst_31 = arith.constant dense<0.000000e+00> : vector<8xf32>
    %44 = vector.multi_reduction <add>, %43, %cst_31 [1] : vector<8x8xf32> to vector<8xf32>
    %45 = vector.shape_cast %44 : vector<8xf32> to vector<8x1xf32>
    %cst_32 = arith.constant 1.000000e+00 : f32
    %46 = vector.broadcast %cst_32 : f32 to vector<8x1xf32>
    %47 = arith.divf %46, %45 : vector<8x1xf32>
    %48 = vector.broadcast %47 : vector<8x1xf32> to vector<8x8xf32>
    %49 = arith.mulf %43, %48 : vector<8x8xf32>
    %50 = arith.truncf %49 : vector<8x8xf32> to vector<8x8xbf16>
    %c0_33 = arith.constant 0 : index
    %c0_34 = arith.constant 0 : index
    %c0_35 = arith.constant 0 : index
    %c0_36 = arith.constant 0 : index
    %51 = vector.load %arg9[%c0_33, %c0_34, %c0_35, %c0_36] : memref<1x1x8x8xbf16, #tpu.memory_space<vmem>>, vector<1x1x8x8xbf16>
    %52 = vector.shape_cast %51 : vector<1x1x8x8xbf16> to vector<8x8xbf16>
    %53 = vector.shape_cast %50 : vector<8x8xbf16> to vector<1x1x8x8xbf16>
    tpu.vector_store %arg9[%c0_33, %c0_34, %c0_35, %c0_36], %53 {strides = array<i32>} : memref<1x1x8x8xbf16, #tpu.memory_space<vmem>>, vector<1x1x8x8xbf16>,
    %54 = arith.truncf %49 : vector<8x8xf32> to vector<8x8xbf16>
    %c0_37 = arith.constant 0 : index
    %c0_38 = arith.constant 0 : index
    %c0_39 = arith.constant 0 : index
    %c0_40 = arith.constant 0 : index
    %55 = vector.load %arg5[%c0_37, %c0_38, %c0_39, %c0_40] : memref<1x1x8x8xbf16, #tpu.memory_space<vmem>>, vector<1x1x8x8xbf16>
    %56 = vector.shape_cast %55 : vector<1x1x8x8xbf16> to vector<8x8xbf16>
    %cst_41 = arith.constant dense<0.000000e+00> : vector<8x8xf32>
    %57 = tpu.matmul %54, %56, %cst_41 {dimension_numbers = #tpu.dot_dimension_numbers<[1], [0], [0], [1], [0, 0, 1, 1], [], []>} : vector<8x8xbf16>, vector<8x8xbf16>, vector<8x8xf32> -> vector<8x8xf32>
    %58 = arith.truncf %57 : vector<8x8xf32> to vector<8x8xbf16>
    %c0_42 = arith.constant 0 : index
    %c0_43 = arith.constant 0 : index
    %c0_44 = arith.constant 0 : index
    %c0_45 = arith.constant 0 : index
    %59 = vector.load %arg10[%c0_42, %c0_43, %c0_44, %c0_45] : memref<1x1x8x8xbf16, #tpu.memory_space<vmem>>, vector<1x1x8x8xbf16>
    %60 = vector.shape_cast %59 : vector<1x1x8x8xbf16> to vector<8x8xbf16>
    %61 = vector.shape_cast %58 : vector<8x8xbf16> to vector<1x1x8x8xbf16>
    tpu.vector_store %arg10[%c0_42, %c0_43, %c0_44, %c0_45], %61 {strides = array<i32>} : memref<1x1x8x8xbf16, #tpu.memory_space<vmem>>, vector<1x1x8x8xbf16>,
    return
  }
  func.func @transform_0(%arg0: i32, %arg1: i32) -> (i32, i32, i32, i32) {
    %c0_i32 = arith.constant 0 : i32
    %c0_i32_0 = arith.constant 0 : i32
    %c0_i32_1 = arith.constant 0 : i32
    return %arg0, %arg1, %c0_i32, %c0_i32_0 : i32, i32, i32, i32
  }
  func.func @transform_1(%arg0: i32, %arg1: i32) -> (i32, i32, i32, i32) {
    %c0_i32 = arith.constant 0 : i32
    %c0_i32_0 = arith.constant 0 : i32
    %c0_i32_1 = arith.constant 0 : i32
    return %arg0, %arg1, %c0_i32, %c0_i32_0 : i32, i32, i32, i32
  }
  func.func @transform_2(%arg0: i32, %arg1: i32) -> (i32, i32, i32, i32) {
    %c0_i32 = arith.constant 0 : i32
    %c0_i32_0 = arith.constant 0 : i32
    %c0_i32_1 = arith.constant 0 : i32
    return %arg0, %arg1, %c0_i32, %c0_i32_0 : i32, i32, i32, i32
  }
  func.func @transform_3(%arg0: i32, %arg1: i32) -> (i32, i32, i32, i32) {
    %c0_i32 = arith.constant 0 : i32
    %c0_i32_0 = arith.constant 0 : i32
    %c0_i32_1 = arith.constant 0 : i32
    return %arg0, %arg1, %c0_i32, %c0_i32_0 : i32, i32, i32, i32
  }
  func.func @transform_4(%arg0: i32, %arg1: i32) -> (i32, i32, i32) {
    %c4_i32 = arith.constant 4 : i32
    %0 = arith.muli %arg0, %c4_i32 : i32
    %1 = arith.addi %0, %arg1 : i32
    %c2_i32 = arith.constant 2 : i32
    %c0_i32 = arith.constant 0 : i32
    %2 = arith.cmpi eq, %c2_i32, %c0_i32 : i32
    %c1_i32 = arith.constant 1 : i32
    %3 = arith.select %2, %c1_i32, %c2_i32 : i32
    %4 = arith.remsi %1, %3 : i32
    %c0_i32_0 = arith.constant 0 : i32
    %5 = arith.cmpi ne, %4, %c0_i32_0 : i32
    %c0_i32_1 = arith.constant 0 : i32
    %6 = arith.cmpi slt, %4, %c0_i32_1 : i32
    %c0_i32_2 = arith.constant 0 : i32
    %7 = arith.cmpi slt, %3, %c0_i32_2 : i32
    %8 = arith.xori %6, %7 : i1
    %9 = arith.andi %8, %5 : i1
    %10 = arith.addi %4, %3 : i32
    %11 = arith.select %9, %10, %4 : i32
    %c0_i32_3 = arith.constant 0 : i32
    %c0_i32_4 = arith.constant 0 : i32
    %c0_i32_5 = arith.constant 0 : i32
    return %11, %c0_i32_3, %c0_i32_4 : i32, i32, i32
  }
  func.func @transform_5(%arg0: i32, %arg1: i32) -> (i32, i32, i32) {
    %c4_i32 = arith.constant 4 : i32
    %0 = arith.muli %arg0, %c4_i32 : i32
    %1 = arith.addi %0, %arg1 : i32
    %c2_i32 = arith.constant 2 : i32
    %c0_i32 = arith.constant 0 : i32
    %2 = arith.cmpi eq, %c2_i32, %c0_i32 : i32
    %c1_i32 = arith.constant 1 : i32
    %3 = arith.select %2, %c1_i32, %c2_i32 : i32
    %4 = arith.remsi %1, %3 : i32
    %c0_i32_0 = arith.constant 0 : i32
    %5 = arith.cmpi ne, %4, %c0_i32_0 : i32
    %c0_i32_1 = arith.constant 0 : i32
    %6 = arith.cmpi slt, %4, %c0_i32_1 : i32
    %c0_i32_2 = arith.constant 0 : i32
    %7 = arith.cmpi slt, %3, %c0_i32_2 : i32
    %8 = arith.xori %6, %7 : i1
    %9 = arith.andi %8, %5 : i1
    %10 = arith.addi %4, %3 : i32
    %11 = arith.select %9, %10, %4 : i32
    %c0_i32_3 = arith.constant 0 : i32
    %c0_i32_4 = arith.constant 0 : i32
    %c0_i32_5 = arith.constant 0 : i32
    return %11, %c0_i32_3, %c0_i32_4 : i32, i32, i32
  }
  func.func @transform_6(%arg0: i32, %arg1: i32) -> (i32, i32, i32, i32) {
    %c0_i32 = arith.constant 0 : i32
    %c0_i32_0 = arith.constant 0 : i32
    %c0_i32_1 = arith.constant 0 : i32
    return %arg0, %arg1, %c0_i32, %c0_i32_0 : i32, i32, i32, i32
  }
  func.func @transform_7(%arg0: i32, %arg1: i32) -> (i32, i32, i32, i32) {
    %c0_i32 = arith.constant 0 : i32
    %c0_i32_0 = arith.constant 0 : i32
    %c0_i32_1 = arith.constant 0 : i32
    return %arg0, %arg1, %c0_i32, %c0_i32_0 : i32, i32, i32, i32
  }
  func.func @transform_8(%arg0: i32, %arg1: i32) -> (i32, i32, i32, i32) {
    %c0_i32 = arith.constant 0 : i32
    %c0_i32_0 = arith.constant 0 : i32
    %c0_i32_1 = arith.constant 0 : i32
    return %arg0, %arg1, %c0_i32, %c0_i32_0 : i32, i32, i32, i32
  }
}

module attributes {stable_mosaic.version = 11 : i64} {
  func.func @_post_ffn_kernel(%arg0: i32, %arg1: memref<16x32xbf16, #tpu.memory_space<vmem>>, %arg2: memref<16x32xf32, #tpu.memory_space<vmem>>, %arg3: memref<16x1xf32, #tpu.memory_space<vmem>>, %arg4: memref<32x32xbf16, #tpu.memory_space<vmem>>, %arg5: memref<1x32xf32, #tpu.memory_space<vmem>>, %arg6: memref<1x32xf32, #tpu.memory_space<vmem>>, %arg7: memref<1x32xf32, #tpu.memory_space<vmem>>, %arg8: memref<32x64xbf16, #tpu.memory_space<vmem>>, %arg9: memref<1x64xf32, #tpu.memory_space<vmem>>, %arg10: memref<64x32xbf16, #tpu.memory_space<vmem>>, %arg11: memref<1x32xf32, #tpu.memory_space<vmem>>, %arg12: memref<1x32xf32, #tpu.memory_space<vmem>>, %arg13: memref<1x32xf32, #tpu.memory_space<vmem>>, %arg14: memref<16x32xf32, #tpu.memory_space<vmem>>) attributes {dimension_semantics = [#tpu.dimension_semantics<parallel>], iteration_bounds = array<i64: 1>, scalar_prefetch = 0 : i64, scratch_operands = 0 : i64, tpu.core_type = #tpu.core_type<tc>, window_params = [{transform_indices = @transform_0, window_bounds = array<i64: 16, 32>}, {transform_indices = @transform_1, window_bounds = array<i64: 16, 32>}, {transform_indices = @transform_2, window_bounds = array<i64: 16, 1>}, {pipeline_mode = #tpu.pipeline_mode<synchronous>, transform_indices = @transform_3, window_bounds = array<i64: 32, 32>}, {pipeline_mode = #tpu.pipeline_mode<synchronous>, transform_indices = @transform_4, window_bounds = array<i64: 1, 32>}, {pipeline_mode = #tpu.pipeline_mode<synchronous>, transform_indices = @transform_5, window_bounds = array<i64: 1, 32>}, {pipeline_mode = #tpu.pipeline_mode<synchronous>, transform_indices = @transform_6, window_bounds = array<i64: 1, 32>}, {pipeline_mode = #tpu.pipeline_mode<synchronous>, transform_indices = @transform_7, window_bounds = array<i64: 32, 64>}, {pipeline_mode = #tpu.pipeline_mode<synchronous>, transform_indices = @transform_8, window_bounds = array<i64: 1, 64>}, {pipeline_mode = #tpu.pipeline_mode<synchronous>, transform_indices = @transform_9, window_bounds = array<i64: 64, 32>}, {pipeline_mode = #tpu.pipeline_mode<synchronous>, transform_indices = @transform_10, window_bounds = array<i64: 1, 32>}, {pipeline_mode = #tpu.pipeline_mode<synchronous>, transform_indices = @transform_11, window_bounds = array<i64: 1, 32>}, {pipeline_mode = #tpu.pipeline_mode<synchronous>, transform_indices = @transform_12, window_bounds = array<i64: 1, 32>}, {transform_indices = @transform_13, window_bounds = array<i64: 16, 32>}]} {
    %c0 = arith.constant 0 : index
    %c0_0 = arith.constant 0 : index
    %0 = vector.load %arg1[%c0, %c0_0] : memref<16x32xbf16, #tpu.memory_space<vmem>>, vector<16x32xbf16>
    %c0_1 = arith.constant 0 : index
    %c0_2 = arith.constant 0 : index
    %1 = vector.load %arg3[%c0_1, %c0_2] : memref<16x1xf32, #tpu.memory_space<vmem>>, vector<16x1xf32>
    %c0_3 = arith.constant 0 : index
    %c0_4 = arith.constant 0 : index
    %2 = vector.load %arg4[%c0_3, %c0_4] : memref<32x32xbf16, #tpu.memory_space<vmem>>, vector<32x32xbf16>
    %cst = arith.constant dense<0.000000e+00> : vector<16x32xf32>
    %3 = tpu.matmul %0, %2, %cst {dimension_numbers = #tpu.dot_dimension_numbers<[1], [0], [0], [1], [0, 0, 1, 1], [], []>} : vector<16x32xbf16>, vector<32x32xbf16>, vector<16x32xf32> -> vector<16x32xf32>
    %c0_5 = arith.constant 0 : index
    %c0_6 = arith.constant 0 : index
    %4 = vector.load %arg5[%c0_5, %c0_6] : memref<1x32xf32, #tpu.memory_space<vmem>>, vector<1x32xf32>
    %5 = vector.broadcast %4 : vector<1x32xf32> to vector<16x32xf32>
    %6 = arith.addf %3, %5 : vector<16x32xf32>
    %c0_7 = arith.constant 0 : index
    %c0_8 = arith.constant 0 : index
    %7 = vector.load %arg2[%c0_7, %c0_8] : memref<16x32xf32, #tpu.memory_space<vmem>>, vector<16x32xf32>
    %8 = arith.addf %6, %7 : vector<16x32xf32>
    %c0_9 = arith.constant 0 : index
    %c0_10 = arith.constant 0 : index
    %9 = vector.load %arg6[%c0_9, %c0_10] : memref<1x32xf32, #tpu.memory_space<vmem>>, vector<1x32xf32>
    %c0_11 = arith.constant 0 : index
    %c0_12 = arith.constant 0 : index
    %10 = vector.load %arg7[%c0_11, %c0_12] : memref<1x32xf32, #tpu.memory_space<vmem>>, vector<1x32xf32>
    %cst_13 = arith.constant dense<0.000000e+00> : vector<16xf32>
    %11 = vector.multi_reduction <add>, %8, %cst_13 [1] : vector<16x32xf32> to vector<16xf32>
    %12 = vector.shape_cast %11 : vector<16xf32> to vector<16x1xf32>
    %cst_14 = arith.constant 3.200000e+01 : f32
    %13 = vector.broadcast %cst_14 : f32 to vector<16x1xf32>
    %14 = arith.divf %12, %13 : vector<16x1xf32>
    %15 = vector.broadcast %14 : vector<16x1xf32> to vector<16x32xf32>
    %16 = arith.subf %8, %15 : vector<16x32xf32>
    %17 = arith.mulf %16, %16 : vector<16x32xf32>
    %cst_15 = arith.constant dense<0.000000e+00> : vector<16xf32>
    %18 = vector.multi_reduction <add>, %17, %cst_15 [1] : vector<16x32xf32> to vector<16xf32>
    %19 = vector.shape_cast %18 : vector<16xf32> to vector<16x1xf32>
    %cst_16 = arith.constant 3.200000e+01 : f32
    %20 = vector.broadcast %cst_16 : f32 to vector<16x1xf32>
    %21 = arith.divf %19, %20 : vector<16x1xf32>
    %22 = vector.broadcast %14 : vector<16x1xf32> to vector<16x32xf32>
    %23 = arith.subf %8, %22 : vector<16x32xf32>
    %cst_17 = arith.constant 9.99999974E-6 : f32
    %24 = vector.broadcast %cst_17 : f32 to vector<16x1xf32>
    %25 = arith.addf %21, %24 : vector<16x1xf32>
    %26 = math.rsqrt %25 : vector<16x1xf32>
    %27 = vector.broadcast %26 : vector<16x1xf32> to vector<16x32xf32>
    %28 = arith.mulf %23, %27 : vector<16x32xf32>
    %29 = vector.broadcast %9 : vector<1x32xf32> to vector<16x32xf32>
    %30 = arith.mulf %28, %29 : vector<16x32xf32>
    %31 = vector.broadcast %10 : vector<1x32xf32> to vector<16x32xf32>
    %32 = arith.addf %30, %31 : vector<16x32xf32>
    %33 = vector.broadcast %1 : vector<16x1xf32> to vector<16x32xf32>
    %34 = arith.mulf %32, %33 : vector<16x32xf32>
    %35 = arith.truncf %34 : vector<16x32xf32> to vector<16x32xbf16>
    %c0_18 = arith.constant 0 : index
    %c0_19 = arith.constant 0 : index
    %36 = vector.load %arg8[%c0_18, %c0_19] : memref<32x64xbf16, #tpu.memory_space<vmem>>, vector<32x64xbf16>
    %cst_20 = arith.constant dense<0.000000e+00> : vector<16x64xf32>
    %37 = tpu.matmul %35, %36, %cst_20 {dimension_numbers = #tpu.dot_dimension_numbers<[1], [0], [0], [1], [0, 0, 1, 1], [], []>} : vector<16x32xbf16>, vector<32x64xbf16>, vector<16x64xf32> -> vector<16x64xf32>
    %c0_21 = arith.constant 0 : index
    %c0_22 = arith.constant 0 : index
    %38 = vector.load %arg9[%c0_21, %c0_22] : memref<1x64xf32, #tpu.memory_space<vmem>>, vector<1x64xf32>
    %39 = vector.broadcast %38 : vector<1x64xf32> to vector<16x64xf32>
    %40 = arith.addf %37, %39 : vector<16x64xf32>
    %cst_23 = arith.constant 0.000000e+00 : f32
    %41 = vector.broadcast %cst_23 : f32 to vector<16x64xf32>
    %42 = arith.maximumf %40, %41 : vector<16x64xf32>
    %43 = arith.truncf %42 : vector<16x64xf32> to vector<16x64xbf16>
    %c0_24 = arith.constant 0 : index
    %c0_25 = arith.constant 0 : index
    %44 = vector.load %arg10[%c0_24, %c0_25] : memref<64x32xbf16, #tpu.memory_space<vmem>>, vector<64x32xbf16>
    %cst_26 = arith.constant dense<0.000000e+00> : vector<16x32xf32>
    %45 = tpu.matmul %43, %44, %cst_26 {dimension_numbers = #tpu.dot_dimension_numbers<[1], [0], [0], [1], [0, 0, 1, 1], [], []>} : vector<16x64xbf16>, vector<64x32xbf16>, vector<16x32xf32> -> vector<16x32xf32>
    %c0_27 = arith.constant 0 : index
    %c0_28 = arith.constant 0 : index
    %46 = vector.load %arg11[%c0_27, %c0_28] : memref<1x32xf32, #tpu.memory_space<vmem>>, vector<1x32xf32>
    %47 = vector.broadcast %46 : vector<1x32xf32> to vector<16x32xf32>
    %48 = arith.addf %45, %47 : vector<16x32xf32>
    %49 = arith.addf %48, %34 : vector<16x32xf32>
    %c0_29 = arith.constant 0 : index
    %c0_30 = arith.constant 0 : index
    %50 = vector.load %arg12[%c0_29, %c0_30] : memref<1x32xf32, #tpu.memory_space<vmem>>, vector<1x32xf32>
    %c0_31 = arith.constant 0 : index
    %c0_32 = arith.constant 0 : index
    %51 = vector.load %arg13[%c0_31, %c0_32] : memref<1x32xf32, #tpu.memory_space<vmem>>, vector<1x32xf32>
    %cst_33 = arith.constant dense<0.000000e+00> : vector<16xf32>
    %52 = vector.multi_reduction <add>, %49, %cst_33 [1] : vector<16x32xf32> to vector<16xf32>
    %53 = vector.shape_cast %52 : vector<16xf32> to vector<16x1xf32>
    %cst_34 = arith.constant 3.200000e+01 : f32
    %54 = vector.broadcast %cst_34 : f32 to vector<16x1xf32>
    %55 = arith.divf %53, %54 : vector<16x1xf32>
    %56 = vector.broadcast %55 : vector<16x1xf32> to vector<16x32xf32>
    %57 = arith.subf %49, %56 : vector<16x32xf32>
    %58 = arith.mulf %57, %57 : vector<16x32xf32>
    %cst_35 = arith.constant dense<0.000000e+00> : vector<16xf32>
    %59 = vector.multi_reduction <add>, %58, %cst_35 [1] : vector<16x32xf32> to vector<16xf32>
    %60 = vector.shape_cast %59 : vector<16xf32> to vector<16x1xf32>
    %cst_36 = arith.constant 3.200000e+01 : f32
    %61 = vector.broadcast %cst_36 : f32 to vector<16x1xf32>
    %62 = arith.divf %60, %61 : vector<16x1xf32>
    %63 = vector.broadcast %55 : vector<16x1xf32> to vector<16x32xf32>
    %64 = arith.subf %49, %63 : vector<16x32xf32>
    %cst_37 = arith.constant 9.99999974E-6 : f32
    %65 = vector.broadcast %cst_37 : f32 to vector<16x1xf32>
    %66 = arith.addf %62, %65 : vector<16x1xf32>
    %67 = math.rsqrt %66 : vector<16x1xf32>
    %68 = vector.broadcast %67 : vector<16x1xf32> to vector<16x32xf32>
    %69 = arith.mulf %64, %68 : vector<16x32xf32>
    %70 = vector.broadcast %50 : vector<1x32xf32> to vector<16x32xf32>
    %71 = arith.mulf %69, %70 : vector<16x32xf32>
    %72 = vector.broadcast %51 : vector<1x32xf32> to vector<16x32xf32>
    %73 = arith.addf %71, %72 : vector<16x32xf32>
    %74 = vector.broadcast %1 : vector<16x1xf32> to vector<16x32xf32>
    %75 = arith.mulf %73, %74 : vector<16x32xf32>
    %c0_38 = arith.constant 0 : index
    %c0_39 = arith.constant 0 : index
    %76 = vector.load %arg14[%c0_38, %c0_39] : memref<16x32xf32, #tpu.memory_space<vmem>>, vector<16x32xf32>
    tpu.vector_store %arg14[%c0_38, %c0_39], %75 {strides = array<i32>} : memref<16x32xf32, #tpu.memory_space<vmem>>, vector<16x32xf32>,
    return
  }
  func.func @transform_0(%arg0: i32) -> (i32, i32) {
    %c0_i32 = arith.constant 0 : i32
    %c0_i32_0 = arith.constant 0 : i32
    return %arg0, %c0_i32 : i32, i32
  }
  func.func @transform_1(%arg0: i32) -> (i32, i32) {
    %c0_i32 = arith.constant 0 : i32
    %c0_i32_0 = arith.constant 0 : i32
    return %arg0, %c0_i32 : i32, i32
  }
  func.func @transform_2(%arg0: i32) -> (i32, i32) {
    %c0_i32 = arith.constant 0 : i32
    %c0_i32_0 = arith.constant 0 : i32
    return %arg0, %c0_i32 : i32, i32
  }
  func.func @transform_3(%arg0: i32) -> (i32, i32) {
    %c0_i32 = arith.constant 0 : i32
    %c0_i32_0 = arith.constant 0 : i32
    %c0_i32_1 = arith.constant 0 : i32
    return %c0_i32, %c0_i32_0 : i32, i32
  }
  func.func @transform_4(%arg0: i32) -> (i32, i32) {
    %c0_i32 = arith.constant 0 : i32
    %c0_i32_0 = arith.constant 0 : i32
    %c0_i32_1 = arith.constant 0 : i32
    return %c0_i32, %c0_i32_0 : i32, i32
  }
  func.func @transform_5(%arg0: i32) -> (i32, i32) {
    %c0_i32 = arith.constant 0 : i32
    %c0_i32_0 = arith.constant 0 : i32
    %c0_i32_1 = arith.constant 0 : i32
    return %c0_i32, %c0_i32_0 : i32, i32
  }
  func.func @transform_6(%arg0: i32) -> (i32, i32) {
    %c0_i32 = arith.constant 0 : i32
    %c0_i32_0 = arith.constant 0 : i32
    %c0_i32_1 = arith.constant 0 : i32
    return %c0_i32, %c0_i32_0 : i32, i32
  }
  func.func @transform_7(%arg0: i32) -> (i32, i32) {
    %c0_i32 = arith.constant 0 : i32
    %c0_i32_0 = arith.constant 0 : i32
    %c0_i32_1 = arith.constant 0 : i32
    return %c0_i32, %c0_i32_0 : i32, i32
  }
  func.func @transform_8(%arg0: i32) -> (i32, i32) {
    %c0_i32 = arith.constant 0 : i32
    %c0_i32_0 = arith.constant 0 : i32
    %c0_i32_1 = arith.constant 0 : i32
    return %c0_i32, %c0_i32_0 : i32, i32
  }
  func.func @transform_9(%arg0: i32) -> (i32, i32) {
    %c0_i32 = arith.constant 0 : i32
    %c0_i32_0 = arith.constant 0 : i32
    %c0_i32_1 = arith.constant 0 : i32
    return %c0_i32, %c0_i32_0 : i32, i32
  }
  func.func @transform_10(%arg0: i32) -> (i32, i32) {
    %c0_i32 = arith.constant 0 : i32
    %c0_i32_0 = arith.constant 0 : i32
    %c0_i32_1 = arith.constant 0 : i32
    return %c0_i32, %c0_i32_0 : i32, i32
  }
  func.func @transform_11(%arg0: i32) -> (i32, i32) {
    %c0_i32 = arith.constant 0 : i32
    %c0_i32_0 = arith.constant 0 : i32
    %c0_i32_1 = arith.constant 0 : i32
    return %c0_i32, %c0_i32_0 : i32, i32
  }
  func.func @transform_12(%arg0: i32) -> (i32, i32) {
    %c0_i32 = arith.constant 0 : i32
    %c0_i32_0 = arith.constant 0 : i32
    %c0_i32_1 = arith.constant 0 : i32
    return %c0_i32, %c0_i32_0 : i32, i32
  }
  func.func @transform_13(%arg0: i32) -> (i32, i32) {
    %c0_i32 = arith.constant 0 : i32
    %c0_i32_0 = arith.constant 0 : i32
    return %arg0, %c0_i32 : i32, i32
  }
}

</mosaic_0001>

<llo_original>
// kernel: decoder_layer.2
$region0: #{decoder_layer.2}
  #allocation0 [shape = 'u32[]', space=smem, size = 0x4, offset = 0x4, fixed_abs, tag = 'smem constant byte address 0x4 - core index']
  #allocation1 [shape = 'u32[144,128]{1,0:T(1,128)}', space=vmem, size = 0x12000, scoped, tag = 'internal scratch']
  %s0 = inlined_call_operand.vmem [shape: bf16[2,4,8,8], index: 0, kind: input, shape index: {}]
  %s1 = inlined_call_operand.vmem [shape: bf16[2,4,8,8], index: 1, kind: input, shape index: {}]
  %s2 = inlined_call_operand.vmem [shape: bf16[2,4,8,8], index: 2, kind: input, shape index: {}]
  %s3 = inlined_call_operand.vmem [shape: bf16[2,4,8,8], index: 3, kind: input, shape index: {}]
  %s4 = inlined_call_operand.vmem [shape: s8[2,8,8], index: 4, kind: input, shape index: {}]
  %s5 = inlined_call_operand.vmem [shape: s8[2,8,8], index: 5, kind: input, shape index: {}]
  %s6 = inlined_call_operand.hbm [shape: bf16[2,4,8,8], index: 6, kind: output, shape index: {0}]
  %s7 = inlined_call_operand.hbm [shape: bf16[2,4,8,8], index: 7, kind: output, shape index: {1}]
  %s8 = inlined_call_operand.vmem [shape: bf16[2,4,8,8], index: 8, kind: output, shape index: {2}]
  %9 = xla_tuple %s6, %s7, %s8
  %s10 = sld [smem:[#allocation0]]
  $region73: #{decoder_layer.2} parent=0
    _
  %s12 = ssub.s32 1, %s10
  %s13 = scalar_select 0, %s12, %s10
  $region1: #{decoder_layer.2} parent=0
    #allocation2 [shape = 'u8[4096]{0}', space=vmem, size = 0x1000, scoped, tag = 'output window, operand 0']
    #allocation3 [shape = 's32[2]{0}', space=sflag, size = 0x8, scoped, tag = 'scoped memory for decoder_layer.2']
    #allocation4 [shape = 'u8[4096]{0}', space=vmem, size = 0x1000, scoped, tag = 'output window, operand 1']
    #allocation5 [shape = 's32[2]{0}', space=sflag, size = 0x8, scoped, tag = 'scoped memory for decoder_layer.2']
    %14 = vsyncpa [#allocation3], 0
    %s15 = scalar_lea.sflag [#allocation3], 1
    %16 = vsyncpa %s15, 0
    %17 = vsyncpa [#allocation5], 0
    %s18 = scalar_lea.sflag [#allocation5], 1
    %19 = vsyncpa %s18, 0
    loop: start=0, step=1, limit=10
    $region2: #{decoder_layer.2} parent=1 // loop_pre_header
      _
    $region3: #{decoder_layer.2} parent=1 // loop_header
      %s21 = sphi 0, %s25
      %p22 = scmp.ge.s32.totalorder %s21, 10
      %s28 = sphi 0, %s40
      %s29 = sphi 0, %s36
      %s30 = sphi 0, %s28
      %s31 = sphi 0, %s29
      %s32 = sphi 0, %s30
      %s33 = sphi 0, %s31
      %s45 = sphi 0, %s47
      %s48 = sphi 0, %s45
      %s49 = sphi 0, %s48
      %s65 = sphi 0, %s49
      %s73 = sphi 0, %s75
      %s76 = sphi 0, %s73
      %s77 = sphi 0, %s76
      %s93 = sphi 0, %s77
      %s101 = sphi 0, %s103
      %s104 = sphi 0, %s101
      %s105 = sphi 0, %s104
      %s121 = sphi 0, %s105
      %s129 = sphi 0, %s131
      %s132 = sphi 0, %s129
      %s133 = sphi 0, %s132
      %s149 = sphi 0, %s133
      %s183 = sphi 0, %s185
      %s186 = sphi 0, %s183
      %s187 = sphi 0, %s186
      %s203 = sphi 0, %s187
      %s237 = sphi 0, %s239
      %s240 = sphi 0, %s237
      %s241 = sphi 0, %s240
      %s257 = sphi 0, %s241
      %s265 = sphi 0, %s267
      %s268 = sphi 0, %s265
      %s269 = sphi 0, %s268
      %s285 = sphi 0, %s269
      %s293 = sphi 0, %s295
      %s296 = sphi 0, %s293
      %s297 = sphi 0, %s296
      %s313 = sphi 0, %s297
      %s321 = sphi 0, %s323
      %s324 = sphi 0, %s321
      %s325 = sphi 0, %s324
      %s341 = sphi 0, %s325
    $region4: #{decoder_layer.2} parent=1 // loop_header_branch
      %24 = sbr.rel (%p22) target = $region8
    $region5: #{decoder_layer.2} parent=1 // loop_body
      %s26 = ssub.s32 %s21, 1
      %s27 = ssub.s32 %s21, 2
      %s34 = sadd.s32 1, %s29
      %p35 = scmp.ge.s32.totalorder %s34, 4
      %s36 = scalar_select %p35, 0, %s34
      %s37 = sadd.s32 1, %s28
      %s38 = scalar_select %p35, %s37, %s28
      %p39 = scmp.ge.s32.totalorder %s38, 2
      %s40 = scalar_select %p39, 0, %s38
      %s41 = ssub.s32 %s28, %s40
      %s42 = ssub.s32 %s29, %s36
      %s43 = sor.u32 %s41, %s42
      %p44 = scmp.eq.s32.totalorder %s43, 0
      %s46 = sadd.s32 %s45, 1
      %s47 = scalar_select %p44, %s45, %s46
      %p50 = pneg %p44
      %p51 = scmp.eq.s32.totalorder %s21, 7
      %p52 = por %p50, %p51
      %p53 = scmp.ne.s32.totalorder %s45, %s48
      %p54 = scmp.eq.s32.totalorder %s21, 0
      %p55 = por %p53, %p54
      %p56 = scmp.ne.s32.totalorder %s45, %s48
      %p57 = scmp.eq.s32.totalorder %s26, 7
      %p58 = por %p56, %p57
      %p59 = scmp.ne.s32.totalorder %s48, %s49
      %p60 = scmp.eq.s32.totalorder %s26, 0
      %p61 = por %p59, %p60
      %p62 = scmp.ne.s32.totalorder %s48, %s49
      %p63 = scmp.eq.s32.totalorder %s27, 7
      %p64 = por %p62, %p63
      %p66 = scmp.ne.s32.totalorder %s49, %s65
      %p67 = scmp.eq.s32.totalorder %s27, 0
      %p68 = por %p66, %p67
      %s69 = ssub.s32 %s28, %s40
      %s70 = ssub.s32 %s29, %s36
      %s71 = sor.u32 %s69, %s70
      %p72 = scmp.eq.s32.totalorder %s71, 0
      %s74 = sadd.s32 %s73, 1
      %s75 = scalar_select %p72, %s73, %s74
      %p78 = pneg %p72
      %p79 = scmp.eq.s32.totalorder %s21, 7
      %p80 = por %p78, %p79
      %p81 = scmp.ne.s32.totalorder %s73, %s76
      %p82 = scmp.eq.s32.totalorder %s21, 0
      %p83 = por %p81, %p82
      %p84 = scmp.ne.s32.totalorder %s73, %s76
      %p85 = scmp.eq.s32.totalorder %s26, 7
      %p86 = por %p84, %p85
      %p87 = scmp.ne.s32.totalorder %s76, %s77
      %p88 = scmp.eq.s32.totalorder %s26, 0
      %p89 = por %p87, %p88
      %p90 = scmp.ne.s32.totalorder %s76, %s77
      %p91 = scmp.eq.s32.totalorder %s27, 7
      %p92 = por %p90, %p91
      %p94 = scmp.ne.s32.totalorder %s77, %s93
      %p95 = scmp.eq.s32.totalorder %s27, 0
      %p96 = por %p94, %p95
      %s97 = ssub.s32 %s28, %s40
      %s98 = ssub.s32 %s29, %s36
      %s99 = sor.u32 %s97, %s98
      %p100 = scmp.eq.s32.totalorder %s99, 0
      %s102 = sadd.s32 %s101, 1
      %s103 = scalar_select %p100, %s101, %s102
      %p106 = pneg %p100
      %p107 = scmp.eq.s32.totalorder %s21, 7
      %p108 = por %p106, %p107
      %p109 = scmp.ne.s32.totalorder %s101, %s104
      %p110 = scmp.eq.s32.totalorder %s21, 0
      %p111 = por %p109, %p110
      %p112 = scmp.ne.s32.totalorder %s101, %s104
      %p113 = scmp.eq.s32.totalorder %s26, 7
      %p114 = por %p112, %p113
      %p115 = scmp.ne.s32.totalorder %s104, %s105
      %p116 = scmp.eq.s32.totalorder %s26, 0
      %p117 = por %p115, %p116
      %p118 = scmp.ne.s32.totalorder %s104, %s105
      %p119 = scmp.eq.s32.totalorder %s27, 7
      %p120 = por %p118, %p119
      %p122 = scmp.ne.s32.totalorder %s105, %s121
      %p123 = scmp.eq.s32.totalorder %s27, 0
      %p124 = por %p122, %p123
      %s125 = ssub.s32 %s28, %s40
      %s126 = ssub.s32 %s29, %s36
      %s127 = sor.u32 %s125, %s126
      %p128 = scmp.eq.s32.totalorder %s127, 0
      %s130 = sadd.s32 %s129, 1
      %s131 = scalar_select %p128, %s129, %s130
      %p134 = pneg %p128
      %p135 = scmp.eq.s32.totalorder %s21, 7
      %p136 = por %p134, %p135
      %p137 = scmp.ne.s32.totalorder %s129, %s132
      %p138 = scmp.eq.s32.totalorder %s21, 0
      %p139 = por %p137, %p138
      %p140 = scmp.ne.s32.totalorder %s129, %s132
      %p141 = scmp.eq.s32.totalorder %s26, 7
      %p142 = por %p140, %p141
      %p143 = scmp.ne.s32.totalorder %s132, %s133
      %p144 = scmp.eq.s32.totalorder %s26, 0
      %p145 = por %p143, %p144
      %p146 = scmp.ne.s32.totalorder %s132, %s133
      %p147 = scmp.eq.s32.totalorder %s27, 7
      %p148 = por %p146, %p147
      %p150 = scmp.ne.s32.totalorder %s133, %s149
      %p151 = scmp.eq.s32.totalorder %s27, 0
      %p152 = por %p150, %p151
      %s153 = smul.u32 %s28, 4
      %s154 = sadd.s32 %s153, %s29
      %p155 = scmp.lt.s32.totalorder %s154, 0
      %s156 = ssub.s32 0, %s154
      %s157 = scalar_select %p155, %s156, %s154
      %s158 = sand.u32 %s157, 1
      %s159 = ssub.s32 0, %s158
      %s160 = scalar_select %p155, %s159, %s158
      %p161 = scmp.ne.s32.totalorder %s160, 0
      %p162 = scmp.lt.s32.totalorder %s160, 0
      %p163 = pnand %p162, %p161
      %p164 = pneg %p163
      %s165 = sadd.s32 %s160, 2
      %s166 = scalar_select %p164, %s165, %s160
      %s167 = smul.u32 %s40, 4
      %s168 = sadd.s32 %s167, %s36
      %p169 = scmp.lt.s32.totalorder %s168, 0
      %s170 = ssub.s32 0, %s168
      %s171 = scalar_select %p169, %s170, %s168
      %s172 = sand.u32 %s171, 1
      %s173 = ssub.s32 0, %s172
      %s174 = scalar_select %p169, %s173, %s172
      %p175 = scmp.ne.s32.totalorder %s174, 0
      %p176 = scmp.lt.s32.totalorder %s174, 0
      %p177 = pnand %p176, %p175
      %p178 = pneg %p177
      %s179 = sadd.s32 %s174, 2
      %s180 = scalar_select %p178, %s179, %s174
      %s181 = ssub.s32 %s166, %s180
      %p182 = scmp.eq.s32.totalorder %s181, 0
      %s184 = sadd.s32 %s183, 1
      %s185 = scalar_select %p182, %s183, %s184
      %p188 = pneg %p182
      %p189 = scmp.eq.s32.totalorder %s21, 7
      %p190 = por %p188, %p189
      %p191 = scmp.ne.s32.totalorder %s183, %s186
      %p192 = scmp.eq.s32.totalorder %s21, 0
      %p193 = por %p191, %p192
      %p194 = scmp.ne.s32.totalorder %s183, %s186
      %p195 = scmp.eq.s32.totalorder %s26, 7
      %p196 = por %p194, %p195
      %p197 = scmp.ne.s32.totalorder %s186, %s187
      %p198 = scmp.eq.s32.totalorder %s26, 0
      %p199 = por %p197, %p198
      %p200 = scmp.ne.s32.totalorder %s186, %s187
      %p201 = scmp.eq.s32.totalorder %s27, 7
      %p202 = por %p200, %p201
      %p204 = scmp.ne.s32.totalorder %s187, %s203
      %p205 = scmp.eq.s32.totalorder %s27, 0
      %p206 = por %p204, %p205
      %s207 = smul.u32 %s28, 4
      %s208 = sadd.s32 %s207, %s29
      %p209 = scmp.lt.s32.totalorder %s208, 0
      %s210 = ssub.s32 0, %s208
      %s211 = scalar_select %p209, %s210, %s208
      %s212 = sand.u32 %s211, 1
      %s213 = ssub.s32 0, %s212
      %s214 = scalar_select %p209, %s213, %s212
      %p215 = scmp.ne.s32.totalorder %s214, 0
      %p216 = scmp.lt.s32.totalorder %s214, 0
      %p217 = pnand %p216, %p215
      %p218 = pneg %p217
      %s219 = sadd.s32 %s214, 2
      %s220 = scalar_select %p218, %s219, %s214
      %s221 = smul.u32 %s40, 4
      %s222 = sadd.s32 %s221, %s36
      %p223 = scmp.lt.s32.totalorder %s222, 0
      %s224 = ssub.s32 0, %s222
      %s225 = scalar_select %p223, %s224, %s222
      %s226 = sand.u32 %s225, 1
      %s227 = ssub.s32 0, %s226
      %s228 = scalar_select %p223, %s227, %s226
      %p229 = scmp.ne.s32.totalorder %s228, 0
      %p230 = scmp.lt.s32.totalorder %s228, 0
      %p231 = pnand %p230, %p229
      %p232 = pneg %p231
      %s233 = sadd.s32 %s228, 2
      %s234 = scalar_select %p232, %s233, %s228
      %s235 = ssub.s32 %s220, %s234
      %p236 = scmp.eq.s32.totalorder %s235, 0
      %s238 = sadd.s32 %s237, 1
      %s239 = scalar_select %p236, %s237, %s238
      %p242 = pneg %p236
      %p243 = scmp.eq.s32.totalorder %s21, 7
      %p244 = por %p242, %p243
      %p245 = scmp.ne.s32.totalorder %s237, %s240
      %p246 = scmp.eq.s32.totalorder %s21, 0
      %p247 = por %p245, %p246
      %p248 = scmp.ne.s32.totalorder %s237, %s240
      %p249 = scmp.eq.s32.totalorder %s26, 7
      %p250 = por %p248, %p249
      %p251 = scmp.ne.s32.totalorder %s240, %s241
      %p252 = scmp.eq.s32.totalorder %s26, 0
      %p253 = por %p251, %p252
      %p254 = scmp.ne.s32.totalorder %s240, %s241
      %p255 = scmp.eq.s32.totalorder %s27, 7
      %p256 = por %p254, %p255
      %p258 = scmp.ne.s32.totalorder %s241, %s257
      %p259 = scmp.eq.s32.totalorder %s27, 0
      %p260 = por %p258, %p259
      %s261 = ssub.s32 %s28, %s40
      %s262 = ssub.s32 %s29, %s36
      %s263 = sor.u32 %s261, %s262
      %p264 = scmp.eq.s32.totalorder %s263, 0
      %s266 = sadd.s32 %s265, 1
      %s267 = scalar_select %p264, %s265, %s266
      %p270 = pneg %p264
      %p271 = scmp.eq.s32.totalorder %s21, 7
      %p272 = por %p270, %p271
      %p273 = scmp.ne.s32.totalorder %s265, %s268
      %p274 = scmp.eq.s32.totalorder %s21, 0
      %p275 = por %p273, %p274
      %p276 = scmp.ne.s32.totalorder %s265, %s268
      %p277 = scmp.eq.s32.totalorder %s26, 7
      %p278 = por %p276, %p277
      %p279 = scmp.ne.s32.totalorder %s268, %s269
      %p280 = scmp.eq.s32.totalorder %s26, 0
      %p281 = por %p279, %p280
      %p282 = scmp.ne.s32.totalorder %s268, %s269
      %p283 = scmp.eq.s32.totalorder %s27, 7
      %p284 = por %p282, %p283
      %p286 = scmp.ne.s32.totalorder %s269, %s285
      %p287 = scmp.eq.s32.totalorder %s27, 0
      %p288 = por %p286, %p287
      %s289 = ssub.s32 %s28, %s40
      %s290 = ssub.s32 %s29, %s36
      %s291 = sor.u32 %s289, %s290
      %p292 = scmp.eq.s32.totalorder %s291, 0
      %s294 = sadd.s32 %s293, 1
      %s295 = scalar_select %p292, %s293, %s294
      %p298 = pneg %p292
      %p299 = scmp.eq.s32.totalorder %s21, 7
      %p300 = por %p298, %p299
      %p301 = scmp.ne.s32.totalorder %s293, %s296
      %p302 = scmp.eq.s32.totalorder %s21, 0
      %p303 = por %p301, %p302
      %p304 = scmp.ne.s32.totalorder %s293, %s296
      %p305 = scmp.eq.s32.totalorder %s26, 7
      %p306 = por %p304, %p305
      %p307 = scmp.ne.s32.totalorder %s296, %s297
      %p308 = scmp.eq.s32.totalorder %s26, 0
      %p309 = por %p307, %p308
      %p310 = scmp.ne.s32.totalorder %s296, %s297
      %p311 = scmp.eq.s32.totalorder %s27, 7
      %p312 = por %p310, %p311
      %p314 = scmp.ne.s32.totalorder %s297, %s313
      %p315 = scmp.eq.s32.totalorder %s27, 0
      %p316 = por %p314, %p315
      %s317 = ssub.s32 %s28, %s40
      %s318 = ssub.s32 %s29, %s36
      %s319 = sor.u32 %s317, %s318
      %p320 = scmp.eq.s32.totalorder %s319, 0
      %s322 = sadd.s32 %s321, 1
      %s323 = scalar_select %p320, %s321, %s322
      %p326 = pneg %p320
      %p327 = scmp.eq.s32.totalorder %s21, 7
      %p328 = por %p326, %p327
      %p329 = scmp.ne.s32.totalorder %s321, %s324
      %p330 = scmp.eq.s32.totalorder %s21, 0
      %p331 = por %p329, %p330
      %p332 = scmp.ne.s32.totalorder %s321, %s324
      %p333 = scmp.eq.s32.totalorder %s26, 7
      %p334 = por %p332, %p333
      %p335 = scmp.ne.s32.totalorder %s324, %s325
      %p336 = scmp.eq.s32.totalorder %s26, 0
      %p337 = por %p335, %p336
      %p338 = scmp.ne.s32.totalorder %s324, %s325
      %p339 = scmp.eq.s32.totalorder %s27, 7
      %p340 = por %p338, %p339
      %p342 = scmp.ne.s32.totalorder %s325, %s341
      %p343 = scmp.eq.s32.totalorder %s27, 0
      %p344 = por %p342, %p343
      %p345 = scmp.le.s32.totalorder 1, %s21
      %p346 = scmp.lt.s32.totalorder %s21, 9
      %p347 = pnand %p345, %p346
      %p348 = pneg %p347
      // Predicated region
      $region9: #{decoder_layer.2} parent=5 // pred_check
        _
      $region10: #{decoder_layer.2} parent=5 // pred_check_branch
        %350 = sbr.rel (%p347) target = $region12
      $region11: #{decoder_layer.2} parent=5 // pred_region
        %s351 = ssub.s32 %s21, 1
      $region12: #{decoder_layer.2} parent=5 // pred_fallthru
        _
      %p352 = scmp.lt.s32.totalorder %s21, 8
      // Predicated region
      $region13: #{decoder_layer.2} parent=5 // pred_check
        %p353 = pneg %p352
      $region14: #{decoder_layer.2} parent=5 // pred_check_branch
        %355 = sbr.rel (%p353) target = $region16
      $region15: #{decoder_layer.2} parent=5 // pred_region
        // Predicated region
        $region17: #{decoder_layer.2} parent=15 // pred_check
          %p356 = pneg %p55
        $region18: #{decoder_layer.2} parent=15 // pred_check_branch
          %358 = sbr.rel (%p356) target = $region20
        $region19: #{decoder_layer.2} parent=15 // pred_region
          %p359 = scmp.lt.s32.totalorder %s28, 1
          %s360 = scalar_select %p359, %s28, 1
          %p361 = scmp.lt.s32.totalorder %s29, 3
          %s362 = scalar_select %p361, %s29, 3
          %s363 = smul.addr %s360, 4
          %s364 = sadd.s32 %s362, %s363
          %s365 = smul.addr %s364, 4
          %s366 = scalar_lea.vmem %s0, %s365
        $region20: #{decoder_layer.2} parent=15 // pred_fallthru
          _
        // Predicated region
        $region21: #{decoder_layer.2} parent=15 // pred_check
          %p367 = pneg %p83
        $region22: #{decoder_layer.2} parent=15 // pred_check_branch
          %369 = sbr.rel (%p367) target = $region24
        $region23: #{decoder_layer.2} parent=15 // pred_region
          %p370 = scmp.lt.s32.totalorder %s28, 1
          %s371 = scalar_select %p370, %s28, 1
          %p372 = scmp.lt.s32.totalorder %s29, 3
          %s373 = scalar_select %p372, %s29, 3
          %s374 = smul.addr %s371, 4
          %s375 = sadd.s32 %s373, %s374
          %s376 = smul.addr %s375, 4
          %s377 = scalar_lea.vmem %s1, %s376
        $region24: #{decoder_layer.2} parent=15 // pred_fallthru
          _
        // Predicated region
        $region25: #{decoder_layer.2} parent=15 // pred_check
          %p378 = pneg %p111
        $region26: #{decoder_layer.2} parent=15 // pred_check_branch
          %380 = sbr.rel (%p378) target = $region28
        $region27: #{decoder_layer.2} parent=15 // pred_region
          %p381 = scmp.lt.s32.totalorder %s28, 1
          %s382 = scalar_select %p381, %s28, 1
          %p383 = scmp.lt.s32.totalorder %s29, 3
          %s384 = scalar_select %p383, %s29, 3
          %s385 = smul.addr %s382, 4
          %s386 = sadd.s32 %s384, %s385
          %s387 = smul.addr %s386, 4
          %s388 = scalar_lea.vmem %s2, %s387
        $region28: #{decoder_layer.2} parent=15 // pred_fallthru
          _
        // Predicated region
        $region29: #{decoder_layer.2} parent=15 // pred_check
          %p389 = pneg %p139
        $region30: #{decoder_layer.2} parent=15 // pred_check_branch
          %391 = sbr.rel (%p389) target = $region32
        $region31: #{decoder_layer.2} parent=15 // pred_region
          %p392 = scmp.lt.s32.totalorder %s28, 1
          %s393 = scalar_select %p392, %s28, 1
          %p394 = scmp.lt.s32.totalorder %s29, 3
          %s395 = scalar_select %p394, %s29, 3
          %s396 = smul.addr %s393, 4
          %s397 = sadd.s32 %s395, %s396
          %s398 = smul.addr %s397, 4
          %s399 = scalar_lea.vmem %s3, %s398
        $region32: #{decoder_layer.2} parent=15 // pred_fallthru
          _
        // Predicated region
        $region33: #{decoder_layer.2} parent=15 // pred_check
          %p400 = pneg %p193
        $region34: #{decoder_layer.2} parent=15 // pred_check_branch
          %402 = sbr.rel (%p400) target = $region36
        $region35: #{decoder_layer.2} parent=15 // pred_region
          %s403 = smul.u32 %s28, 4
          %s404 = sadd.s32 %s403, %s29
          %p405 = scmp.lt.s32.totalorder %s404, 0
          %s406 = ssub.s32 0, %s404
          %s407 = scalar_select %p405, %s406, %s404
          %s408 = sand.u32 %s407, 1
          %s409 = ssub.s32 0, %s408
          %s410 = scalar_select %p405, %s409, %s408
          %p411 = scmp.ne.s32.totalorder %s410, 0
          %p412 = scmp.lt.s32.totalorder %s410, 0
          %p413 = pnand %p412, %p411
          %p414 = pneg %p413
          %s415 = sadd.s32 %s410, 2
          %s416 = scalar_select %p414, %s415, %s410
          %p417 = scmp.lt.s32.totalorder %s416, 1
          %s418 = scalar_select %p417, %s416, 1
          %s419 = smul.addr %s418, 2
          %s420 = scalar_lea.vmem %s4, %s419
          %s421 = smul.u32 %s28, 4
          %s422 = sadd.s32 %s421, %s29
          %p423 = scmp.lt.s32.totalorder %s422, 0
          %s424 = ssub.s32 0, %s422
          %s425 = scalar_select %p423, %s424, %s422
          %s426 = sand.u32 %s425, 1
          %s427 = ssub.s32 0, %s426
          %s428 = scalar_select %p423, %s427, %s426
          %p429 = scmp.ne.s32.totalorder %s428, 0
          %p430 = scmp.lt.s32.totalorder %s428, 0
          %p431 = pnand %p430, %p429
          %p432 = pneg %p431
          %s433 = sadd.s32 %s428, 2
          %s434 = scalar_select %p432, %s433, %s428
        $region36: #{decoder_layer.2} parent=15 // pred_fallthru
          _
        // Predicated region
        $region37: #{decoder_layer.2} parent=15 // pred_check
          %p435 = pneg %p247
        $region38: #{decoder_layer.2} parent=15 // pred_check_branch
          %437 = sbr.rel (%p435) target = $region40
        $region39: #{decoder_layer.2} parent=15 // pred_region
          %s438 = smul.u32 %s28, 4
          %s439 = sadd.s32 %s438, %s29
          %p440 = scmp.lt.s32.totalorder %s439, 0
          %s441 = ssub.s32 0, %s439
          %s442 = scalar_select %p440, %s441, %s439
          %s443 = sand.u32 %s442, 1
          %s444 = ssub.s32 0, %s443
          %s445 = scalar_select %p440, %s444, %s443
          %p446 = scmp.ne.s32.totalorder %s445, 0
          %p447 = scmp.lt.s32.totalorder %s445, 0
          %p448 = pnand %p447, %p446
          %p449 = pneg %p448
          %s450 = sadd.s32 %s445, 2
          %s451 = scalar_select %p449, %s450, %s445
          %p452 = scmp.lt.s32.totalorder %s451, 1
          %s453 = scalar_select %p452, %s451, 1
          %s454 = smul.addr %s453, 2
          %s455 = scalar_lea.vmem %s5, %s454
          %s456 = smul.u32 %s28, 4
          %s457 = sadd.s32 %s456, %s29
          %p458 = scmp.lt.s32.totalorder %s457, 0
          %s459 = ssub.s32 0, %s457
          %s460 = scalar_select %p458, %s459, %s457
          %s461 = sand.u32 %s460, 1
          %s462 = ssub.s32 0, %s461
          %s463 = scalar_select %p458, %s462, %s461
          %p464 = scmp.ne.s32.totalorder %s463, 0
          %p465 = scmp.lt.s32.totalorder %s463, 0
          %p466 = pnand %p465, %p464
          %p467 = pneg %p466
          %s468 = sadd.s32 %s463, 2
          %s469 = scalar_select %p467, %s468, %s463
        $region40: #{decoder_layer.2} parent=15 // pred_fallthru
          _
      $region16: #{decoder_layer.2} parent=5 // pred_fallthru
        _
      %p470 = scmp.le.s32.totalorder 1, %s21
      %p471 = scmp.lt.s32.totalorder %s21, 9
      %p472 = pnand %p470, %p471
      %p473 = pneg %p472
      // Predicated region
      $region41: #{decoder_layer.2} parent=5 // pred_check
        _
      $region42: #{decoder_layer.2} parent=5 // pred_check_branch
        %475 = sbr.rel (%p472) target = $region44
      $region43: #{decoder_layer.2} parent=5 // pred_region
        %s476 = ssub.s32 %s21, 1
        %p477 = scmp.lt.s32.totalorder %s30, 1
        %s478 = scalar_select %p477, %s30, 1
        %p479 = scmp.lt.s32.totalorder %s31, 3
        %s480 = scalar_select %p479, %s31, 3
        %s481 = smul.addr %s478, 4
        %s482 = sadd.s32 %s480, %s481
        %s483 = smul.addr %s482, 4
        %s484 = scalar_lea.vmem %s0, %s483
        %p485 = pneg %p61
        %p486 = pneg %p58
        %p487 = scmp.lt.s32.totalorder %s30, 1
        %s488 = scalar_select %p487, %s30, 1
        %p489 = scmp.lt.s32.totalorder %s31, 3
        %s490 = scalar_select %p489, %s31, 3
        %s491 = smul.addr %s488, 4
        %s492 = sadd.s32 %s490, %s491
        %s493 = smul.addr %s492, 4
        %s494 = scalar_lea.vmem %s1, %s493
        %p495 = pneg %p89
        %p496 = pneg %p86
        %p497 = scmp.lt.s32.totalorder %s30, 1
        %s498 = scalar_select %p497, %s30, 1
        %p499 = scmp.lt.s32.totalorder %s31, 3
        %s500 = scalar_select %p499, %s31, 3
        %s501 = smul.addr %s498, 4
        %s502 = sadd.s32 %s500, %s501
        %s503 = smul.addr %s502, 4
        %s504 = scalar_lea.vmem %s2, %s503
        %p505 = pneg %p117
        %p506 = pneg %p114
        %p507 = scmp.lt.s32.totalorder %s30, 1
        %s508 = scalar_select %p507, %s30, 1
        %p509 = scmp.lt.s32.totalorder %s31, 3
        %s510 = scalar_select %p509, %s31, 3
        %s511 = smul.addr %s508, 4
        %s512 = sadd.s32 %s510, %s511
        %s513 = smul.addr %s512, 4
        %s514 = scalar_lea.vmem %s3, %s513
        %p515 = pneg %p145
        %p516 = pneg %p142
        %s517 = smul.u32 %s30, 4
        %s518 = sadd.s32 %s517, %s31
        %p519 = scmp.lt.s32.totalorder %s518, 0
        %s520 = ssub.s32 0, %s518
        %s521 = scalar_select %p519, %s520, %s518
        %s522 = sand.u32 %s521, 1
        %s523 = ssub.s32 0, %s522
        %s524 = scalar_select %p519, %s523, %s522
        %p525 = scmp.ne.s32.totalorder %s524, 0
        %p526 = scmp.lt.s32.totalorder %s524, 0
        %p527 = pnand %p526, %p525
        %p528 = pneg %p527
        %s529 = sadd.s32 %s524, 2
        %s530 = scalar_select %p528, %s529, %s524
        %p531 = scmp.lt.s32.totalorder %s530, 1
        %s532 = scalar_select %p531, %s530, 1
        %s533 = smul.addr %s532, 2
        %s534 = scalar_lea.vmem %s4, %s533
        %p535 = pneg %p199
        %p536 = pneg %p196
        %s537 = smul.u32 %s30, 4
        %s538 = sadd.s32 %s537, %s31
        %p539 = scmp.lt.s32.totalorder %s538, 0
        %s540 = ssub.s32 0, %s538
        %s541 = scalar_select %p539, %s540, %s538
        %s542 = sand.u32 %s541, 1
        %s543 = ssub.s32 0, %s542
        %s544 = scalar_select %p539, %s543, %s542
        %p545 = scmp.ne.s32.totalorder %s544, 0
        %p546 = scmp.lt.s32.totalorder %s544, 0
        %p547 = pnand %p546, %p545
        %p548 = pneg %p547
        %s549 = sadd.s32 %s544, 2
        %s550 = scalar_select %p548, %s549, %s544
        %p551 = scmp.lt.s32.totalorder %s550, 1
        %s552 = scalar_select %p551, %s550, 1
        %s553 = smul.addr %s552, 2
        %s554 = scalar_lea.vmem %s5, %s553
        %p555 = pneg %p253
        %p556 = pneg %p250
        %p557 = pneg %p281
        %p558 = pneg %p278
        %s559 = sand.u32 %s268, 1
        %s560 = scalar_lea.sflag [#allocation3], %s559
        %s561 = sand.u32 %s268, 1
        %s562 = smul.addr %s561, 4
        %s563 = scalar_lea.vmem [#allocation2], %s562
        %p564 = pneg %p309
        %p565 = pneg %p306
        %s566 = sand.u32 %s296, 1
        %s567 = scalar_lea.sflag [#allocation5], %s566
        %s568 = sand.u32 %s296, 1
        %s569 = smul.addr %s568, 4
        %s570 = scalar_lea.vmem [#allocation4], %s569
        %p571 = pneg %p337
        %p572 = pneg %p334
        %p573 = scmp.lt.s32.totalorder %s30, 1
        %s574 = scalar_select %p573, %s30, 1
        %p575 = scmp.lt.s32.totalorder %s31, 3
        %s576 = scalar_select %p575, %s31, 3
        %s577 = smul.addr %s574, 4
        %s578 = sadd.s32 %s576, %s577
        %s579 = smul.addr %s578, 4
        %s580 = scalar_lea.vmem %s8, %s579
        %p581 = scmp.lt.s32.totalorder %s30, 1
        %s582 = scalar_select %p581, %s30, 1
        %p583 = scmp.lt.s32.totalorder %s31, 3
        %s584 = scalar_select %p583, %s31, 3
        %s585 = smul.addr %s582, 4
        %s586 = sadd.s32 %s584, %s585
        %s587 = smul.addr %s586, 4
        %s588 = scalar_lea.vmem %s0, %s587
        %p589 = scmp.lt.s32.totalorder %s30, 1
        %s590 = scalar_select %p589, %s30, 1
        %p591 = scmp.lt.s32.totalorder %s31, 3
        %s592 = scalar_select %p591, %s31, 3
        %s593 = smul.addr %s590, 4
        %s594 = sadd.s32 %s592, %s593
        %s595 = smul.addr %s594, 4
        %s596 = scalar_lea.vmem %s1, %s595
        %p597 = scmp.lt.s32.totalorder %s30, 1
        %s598 = scalar_select %p597, %s30, 1
        %p599 = scmp.lt.s32.totalorder %s31, 3
        %s600 = scalar_select %p599, %s31, 3
        %s601 = smul.addr %s598, 4
        %s602 = sadd.s32 %s600, %s601
        %s603 = smul.addr %s602, 4
        %s604 = scalar_lea.vmem %s2, %s603
        %p605 = scmp.lt.s32.totalorder %s30, 1
        %s606 = scalar_select %p605, %s30, 1
        %p607 = scmp.lt.s32.totalorder %s31, 3
        %s608 = scalar_select %p607, %s31, 3
        %s609 = smul.addr %s606, 4
        %s610 = sadd.s32 %s608, %s609
        %s611 = smul.addr %s610, 4
        %s612 = scalar_lea.vmem %s3, %s611
        %s613 = smul.u32 %s30, 4
        %s614 = sadd.s32 %s613, %s31
        %p615 = scmp.lt.s32.totalorder %s614, 0
        %s616 = ssub.s32 0, %s614
        %s617 = scalar_select %p615, %s616, %s614
        %s618 = sand.u32 %s617, 1
        %s619 = ssub.s32 0, %s618
        %s620 = scalar_select %p615, %s619, %s618
        %p621 = scmp.ne.s32.totalorder %s620, 0
        %p622 = scmp.lt.s32.totalorder %s620, 0
        %p623 = pnand %p622, %p621
        %p624 = pneg %p623
        %s625 = sadd.s32 %s620, 2
        %s626 = scalar_select %p624, %s625, %s620
        %p627 = scmp.lt.s32.totalorder %s626, 1
        %s628 = scalar_select %p627, %s626, 1
        %s629 = smul.addr %s628, 2
        %s630 = scalar_lea.vmem %s4, %s629
        %s631 = smul.u32 %s30, 4
        %s632 = sadd.s32 %s631, %s31
        %p633 = scmp.lt.s32.totalorder %s632, 0
        %s634 = ssub.s32 0, %s632
        %s635 = scalar_select %p633, %s634, %s632
        %s636 = sand.u32 %s635, 1
        %s637 = ssub.s32 0, %s636
        %s638 = scalar_select %p633, %s637, %s636
        %p639 = scmp.ne.s32.totalorder %s638, 0
        %p640 = scmp.lt.s32.totalorder %s638, 0
        %p641 = pnand %p640, %p639
        %p642 = pneg %p641
        %s643 = sadd.s32 %s638, 2
        %s644 = scalar_select %p642, %s643, %s638
        %s645 = smul.u32 %s30, 4
        %s646 = sadd.s32 %s645, %s31
        %p647 = scmp.lt.s32.totalorder %s646, 0
        %s648 = ssub.s32 0, %s646
        %s649 = scalar_select %p647, %s648, %s646
        %s650 = sand.u32 %s649, 1
        %s651 = ssub.s32 0, %s650
        %s652 = scalar_select %p647, %s651, %s650
        %p653 = scmp.ne.s32.totalorder %s652, 0
        %p654 = scmp.lt.s32.totalorder %s652, 0
        %p655 = pnand %p654, %p653
        %p656 = pneg %p655
        %s657 = sadd.s32 %s652, 2
        %s658 = scalar_select %p656, %s657, %s652
        %p659 = scmp.lt.s32.totalorder %s658, 1
        %s660 = scalar_select %p659, %s658, 1
        %s661 = smul.addr %s660, 2
        %s662 = scalar_lea.vmem %s5, %s661
        %s663 = smul.u32 %s30, 4
        %s664 = sadd.s32 %s663, %s31
        %p665 = scmp.lt.s32.totalorder %s664, 0
        %s666 = ssub.s32 0, %s664
        %s667 = scalar_select %p665, %s666, %s664
        %s668 = sand.u32 %s667, 1
        %s669 = ssub.s32 0, %s668
        %s670 = scalar_select %p665, %s669, %s668
        %p671 = scmp.ne.s32.totalorder %s670, 0
        %p672 = scmp.lt.s32.totalorder %s670, 0
        %p673 = pnand %p672, %p671
        %p674 = pneg %p673
        %s675 = sadd.s32 %s670, 2
        %s676 = scalar_select %p674, %s675, %s670
        %p677 = scmp.lt.s32.totalorder %s30, 1
        %s678 = scalar_select %p677, %s30, 1
        %p679 = scmp.lt.s32.totalorder %s31, 3
        %s680 = scalar_select %p679, %s31, 3
        %s681 = smul.addr %s678, 4
        %s682 = sadd.s32 %s680, %s681
        %s683 = smul.addr %s682, 4
        %s684 = scalar_lea.vmem %s8, %s683
        %v688 = vld [vmem:[%s588] sm:$0xf]
        %v689 = vld [vmem:[%s596] sm:$0xf]
        %vm690 = vcmask 64512
        %v692 = vsel %vm690, %v688, 0
        %vm694 = vcmask 1043456
        %v696 = vsel %vm694, %v689, 0
        %698 = vmatprep.subr.bf16.mxu0 0
        %699 = vmatpush1.bf16.msra.mxu0 %v696
        %700 = vmatprep.subr.bf16.mxu0 0
        %701 = vmatpush1.bf16.msra.mxu0 0
        %702 = vmatprep.subr.bf16.mxu0 0
        %703 = vmatpush1.bf16.msra.mxu0 0
        %704 = vmatprep.subr.bf16.mxu0 0
        %705 = vmatpush1.bf16.msra.mxu0 0
        %706 = vmatprep.subr.bf16.mxu0 0
        %707 = vmatpush1.bf16.msra.mxu0 0
        %708 = vmatprep.subr.bf16.mxu0 0
        %709 = vmatpush1.bf16.msra.mxu0 0
        %710 = vmatprep.subr.bf16.mxu0 0
        %711 = vmatpush1.bf16.msra.mxu0 0
        %712 = vmatprep.subr.bf16.mxu0 0
        %713 = vmatpush1.bf16.msra.mxu0 0
        %714 = vmatprep.subr.bf16.mxu0 0
        %715 = vmatpush1.bf16.msra.mxu0 0
        %716 = vmatprep.subr.bf16.mxu0 0
        %717 = vmatpush1.bf16.msra.mxu0 0
        %718 = vmatprep.subr.bf16.mxu0 0
        %719 = vmatpush1.bf16.msra.mxu0 0
        %720 = vmatprep.subr.bf16.mxu0 0
        %721 = vmatpush1.bf16.msra.mxu0 0
        %722 = vmatprep.subr.bf16.mxu0 0
        %723 = vmatpush1.bf16.msra.mxu0 0
        %724 = vmatprep.subr.bf16.mxu0 0
        %725 = vmatpush1.bf16.msra.mxu0 0
        %726 = vmatprep.subr.bf16.mxu0 0
        %727 = vmatpush1.bf16.msra.mxu0 0
        %728 = vmatprep.subr.bf16.mxu0 0
        %729 = vmatpush1.bf16.msra.mxu0 0
        %730 = vmatprep.mubr.bf16.mxu0 0
        %731 = vmatmul.mubr.bf16.gmra.mrb[0].mxu0 %v692
        %v732 = vpop.f32.mrb[0].mxu0
        %v733 = vadd.f32 0.0, %v732
        %v734 = vpop.f32.mrb[0].mxu0
        %v735 = vpop.f32.mrb[0].mxu0
        %v736 = vpop.f32.mrb[0].mxu0
        %737 = vdwg.mxu0
        %v738 = vld [vmem:[%s630] sm:$0x3]
        %vm739 = vnez %v738
        %v740 = vmul.f32 %v733, 0.35355338
        %v741 = vsel %vm739, 16843009, 0
        %v742 = vunpack.c.0.s8 %v741
        %vm743 = vcmp.ne.s32.totalorder %v742, 0
        %v744 = vsel %vm743, -1e+09, %v740
        %v745 = vsel %vm690, %v744, -inf
        %746 = vmax.xlane.f32.xlu0 %v745
        %v747 = vpop.xlane.xlu0 %746
        %v748 = vsub.f32 %v744, %v747
        %v749 = vmul.f32 %v748, 1.442695
        %v750 = vpow.pop %v749
        %v751 = vsel %vm690, %v750, 0.0
        %752 = vadd.xlane.f32.xlu0 %v751
        %v753 = vpop.xlane.xlu0 %752
        %v754 = vrcp.pop %v753
        %v755 = vmul.f32 1.0, %v754
        %v756 = vmul.f32 %v750, %v755
        %v757 = vpack.c.bf16 %v756, %v756
        %vm758 = vcmask 60416
        %759 = vst.msk [vmem:[%s563] sm:$0xf] %vm758, %v757
        %v760 = vld [vmem:[%s604] sm:$0xf]
        %v762 = vsel %vm694, %v760, 0
        %764 = vmatprep.subr.bf16.mxu0 0
        %765 = vmatpush1.bf16.msra.mxu0 %v762
        %766 = vmatprep.subr.bf16.mxu0 0
        %767 = vmatpush1.bf16.msra.mxu0 0
        %768 = vmatprep.subr.bf16.mxu0 0
        %769 = vmatpush1.bf16.msra.mxu0 0
        %770 = vmatprep.subr.bf16.mxu0 0
        %771 = vmatpush1.bf16.msra.mxu0 0
        %772 = vmatprep.subr.bf16.mxu0 0
        %773 = vmatpush1.bf16.msra.mxu0 0
        %774 = vmatprep.subr.bf16.mxu0 0
        %775 = vmatpush1.bf16.msra.mxu0 0
        %776 = vmatprep.subr.bf16.mxu0 0
        %777 = vmatpush1.bf16.msra.mxu0 0
        %778 = vmatprep.subr.bf16.mxu0 0
        %779 = vmatpush1.bf16.msra.mxu0 0
        %780 = vmatprep.subr.bf16.mxu0 0
        %781 = vmatpush1.bf16.msra.mxu0 0
        %782 = vmatprep.subr.bf16.mxu0 0
        %783 = vmatpush1.bf16.msra.mxu0 0
        %784 = vmatprep.subr.bf16.mxu0 0
        %785 = vmatpush1.bf16.msra.mxu0 0
        %786 = vmatprep.subr.bf16.mxu0 0
        %787 = vmatpush1.bf16.msra.mxu0 0
        %788 = vmatprep.subr.bf16.mxu0 0
        %789 = vmatpush1.bf16.msra.mxu0 0
        %790 = vmatprep.subr.bf16.mxu0 0
        %791 = vmatpush1.bf16.msra.mxu0 0
        %792 = vmatprep.subr.bf16.mxu0 0
        %793 = vmatpush1.bf16.msra.mxu0 0
        %794 = vmatprep.subr.bf16.mxu0 0
        %795 = vmatpush1.bf16.msra.mxu0 0
        %796 = vmatprep.mubr.bf16.mxu0 0
        %797 = vmatmul.mubr.bf16.gmra.mrb[0].mxu0 %v692
        %v798 = vpop.f32.mrb[0].mxu0
        %v799 = vadd.f32 0.0, %v798
        %v800 = vpop.f32.mrb[0].mxu0
        %v801 = vpop.f32.mrb[0].mxu0
        %v802 = vpop.f32.mrb[0].mxu0
        %803 = vdwg.mxu0
        %v804 = vld [vmem:[%s662] sm:$0x3]
        %vm805 = vnez %v804
        %v806 = vmul.f32 %v799, 0.35355338
        %v807 = vsel %vm805, 16843009, 0
        %v808 = vunpack.c.0.s8 %v807
        %vm809 = vcmp.ne.s32.totalorder %v808, 0
        %v810 = vsel %vm809, -1e+09, %v806
        %v811 = vsel %vm690, %v810, -inf
        %812 = vmax.xlane.f32.xlu0 %v811
        %v813 = vpop.xlane.xlu0 %812
        %v814 = vsub.f32 %v810, %v813
        %v815 = vmul.f32 %v814, 1.442695
        %v816 = vpow.pop %v815
        %v817 = vsel %vm690, %v816, 0.0
        %818 = vadd.xlane.f32.xlu0 %v817
        %v819 = vpop.xlane.xlu0 %818
        %v820 = vrcp.pop %v819
        %v821 = vmul.f32 1.0, %v820
        %v822 = vmul.f32 %v816, %v821
        %v823 = vpack.c.bf16 %v822, %v822
        %824 = vst.msk [vmem:[%s570] sm:$0xf] %vm758, %v823
        %v825 = vld [vmem:[%s612] sm:$0xf]
        %v827 = vsel %vm690, %v823, 0
        %v830 = vsel %vm694, %v825, 0
        %832 = vmatprep.subr.bf16.mxu0 0
        %833 = vmatpush1.bf16.msra.mxu0 %v830
        %834 = vmatprep.subr.bf16.mxu0 0
        %835 = vmatpush1.bf16.msra.mxu0 0
        %836 = vmatprep.subr.bf16.mxu0 0
        %837 = vmatpush1.bf16.msra.mxu0 0
        %838 = vmatprep.subr.bf16.mxu0 0
        %839 = vmatpush1.bf16.msra.mxu0 0
        %840 = vmatprep.subr.bf16.mxu0 0
        %841 = vmatpush1.bf16.msra.mxu0 0
        %842 = vmatprep.subr.bf16.mxu0 0
        %843 = vmatpush1.bf16.msra.mxu0 0
        %844 = vmatprep.subr.bf16.mxu0 0
        %845 = vmatpush1.bf16.msra.mxu0 0
        %846 = vmatprep.subr.bf16.mxu0 0
        %847 = vmatpush1.bf16.msra.mxu0 0
        %848 = vmatprep.subr.bf16.mxu0 0
        %849 = vmatpush1.bf16.msra.mxu0 0
        %850 = vmatprep.subr.bf16.mxu0 0
        %851 = vmatpush1.bf16.msra.mxu0 0
        %852 = vmatprep.subr.bf16.mxu0 0
        %853 = vmatpush1.bf16.msra.mxu0 0
        %854 = vmatprep.subr.bf16.mxu0 0
        %855 = vmatpush1.bf16.msra.mxu0 0
        %856 = vmatprep.subr.bf16.mxu0 0
        %857 = vmatpush1.bf16.msra.mxu0 0
        %858 = vmatprep.subr.bf16.mxu0 0
        %859 = vmatpush1.bf16.msra.mxu0 0
        %860 = vmatprep.subr.bf16.mxu0 0
        %861 = vmatpush1.bf16.msra.mxu0 0
        %862 = vmatprep.subr.bf16.mxu0 0
        %863 = vmatpush1.bf16.msra.mxu0 0
        %864 = vmatprep.mubr.bf16.mxu0 0
        %865 = vmatmul.mubr.bf16.gmra.mrb[0].mxu0 %v827
        %v866 = vpop.f32.mrb[0].mxu0
        %v867 = vadd.f32 0.0, %v866
        %v868 = vpop.f32.mrb[0].mxu0
        %v869 = vpop.f32.mrb[0].mxu0
        %v870 = vpop.f32.mrb[0].mxu0
        %871 = vdwg.mxu0
        %v872 = vpack.c.bf16 %v867, %v867
        %873 = vst.msk [vmem:[%s684] sm:$0xf] %vm758, %v872
        %s874 = sand.u32 %s268, 1
        %s875 = scalar_lea.sflag [#allocation3], %s874
        %s876 = sand.u32 %s268, 1
        %s877 = smul.addr %s876, 4
        %s878 = scalar_lea.vmem [#allocation2], %s877
        %s879 = sand.u32 %s296, 1
        %s880 = scalar_lea.sflag [#allocation5], %s879
        %s881 = sand.u32 %s296, 1
        %s882 = smul.addr %s881, 4
        %s883 = scalar_lea.vmem [#allocation4], %s882
        %p884 = scmp.lt.s32.totalorder %s30, 1
        %s885 = scalar_select %p884, %s30, 1
        %p886 = scmp.lt.s32.totalorder %s31, 3
        %s887 = scalar_select %p886, %s31, 3
        %s888 = smul.addr %s885, 4
        %s889 = sadd.s32 %s887, %s888
        %s890 = smul.addr %s889, 4
        %s891 = scalar_lea.vmem %s8, %s890
        // Predicated region
        $region45: #{decoder_layer.2} parent=43 // pred_check
          %p892 = pneg %p278
        $region46: #{decoder_layer.2} parent=43 // pred_check_branch
          %894 = sbr.rel (%p892) target = $region48
        $region47: #{decoder_layer.2} parent=43 // pred_region
          %s896 = ssub.s32 64, 64
          %897 = vsyncadd %s875, %s896
          %s898 = smul.addr %s30, 4
          %s899 = sadd.s32 %s31, %s898
          %s900 = smul.addr %s899, 64
          %s901 = scalar_lea.hbm %s6, %s900
          %s903 = sshll.u32 %s878, 4
          %s904 = int_to_ptr.vmem [resolvable:$true] %s903
          %906 = dma.vmem_to_hbm [thread:$0]  %s904, 64, %s901, %s875
        $region48: #{decoder_layer.2} parent=43 // pred_fallthru
          _
        // Predicated region
        $region49: #{decoder_layer.2} parent=43 // pred_check
          %p907 = pneg %p306
        $region50: #{decoder_layer.2} parent=43 // pred_check_branch
          %909 = sbr.rel (%p907) target = $region52
        $region51: #{decoder_layer.2} parent=43 // pred_region
          %s911 = ssub.s32 64, 64
          %912 = vsyncadd %s880, %s911
          %s913 = smul.addr %s30, 4
          %s914 = sadd.s32 %s31, %s913
          %s915 = smul.addr %s914, 64
          %s916 = scalar_lea.hbm %s7, %s915
          %s918 = sshll.u32 %s883, 4
          %s919 = int_to_ptr.vmem [resolvable:$true] %s918
          %921 = dma.vmem_to_hbm [thread:$0]  %s919, 64, %s916, %s880
        $region52: #{decoder_layer.2} parent=43 // pred_fallthru
          _
        // Predicated region
        $region53: #{decoder_layer.2} parent=43 // pred_check
          %p922 = pneg %p334
        $region54: #{decoder_layer.2} parent=43 // pred_check_branch
          %924 = sbr.rel (%p922) target = $region56
        $region55: #{decoder_layer.2} parent=43 // pred_region
          _
        $region56: #{decoder_layer.2} parent=43 // pred_fallthru
          _
      $region44: #{decoder_layer.2} parent=5 // pred_fallthru
        _
      %p925 = scmp.le.s32.totalorder 2, %s21
      // Predicated region
      $region57: #{decoder_layer.2} parent=5 // pred_check
        %p926 = pneg %p925
      $region58: #{decoder_layer.2} parent=5 // pred_check_branch
        %928 = sbr.rel (%p926) target = $region60
      $region59: #{decoder_layer.2} parent=5 // pred_region
        %s929 = ssub.s32 %s21, 2
        // Predicated region
        $region61: #{decoder_layer.2} parent=59 // pred_check
          %p930 = pneg %p284
        $region62: #{decoder_layer.2} parent=59 // pred_check_branch
          %932 = sbr.rel (%p930) target = $region64
        $region63: #{decoder_layer.2} parent=59 // pred_region
          %s933 = sand.u32 %s269, 1
          %s934 = scalar_lea.sflag [#allocation3], %s933
          %s935 = sand.u32 %s269, 1
          %s936 = smul.addr %s935, 4
          %s937 = scalar_lea.vmem [#allocation2], %s936
          %938 = dma.done %s934, 64
        $region64: #{decoder_layer.2} parent=59 // pred_fallthru
          _
        // Predicated region
        $region65: #{decoder_layer.2} parent=59 // pred_check
          %p939 = pneg %p312
        $region66: #{decoder_layer.2} parent=59 // pred_check_branch
          %941 = sbr.rel (%p939) target = $region68
        $region67: #{decoder_layer.2} parent=59 // pred_region
          %s942 = sand.u32 %s297, 1
          %s943 = scalar_lea.sflag [#allocation5], %s942
          %s944 = sand.u32 %s297, 1
          %s945 = smul.addr %s944, 4
          %s946 = scalar_lea.vmem [#allocation4], %s945
          %947 = dma.done %s943, 64
        $region68: #{decoder_layer.2} parent=59 // pred_fallthru
          _
        // Predicated region
        $region69: #{decoder_layer.2} parent=59 // pred_check
          %p948 = pneg %p340
        $region70: #{decoder_layer.2} parent=59 // pred_check_branch
          %950 = sbr.rel (%p948) target = $region72
        $region71: #{decoder_layer.2} parent=59 // pred_region
          %p951 = scmp.lt.s32.totalorder %s32, 1
          %s952 = scalar_select %p951, %s32, 1
          %p953 = scmp.lt.s32.totalorder %s33, 3
          %s954 = scalar_select %p953, %s33, 3
          %s955 = smul.addr %s952, 4
          %s956 = sadd.s32 %s954, %s955
          %s957 = smul.addr %s956, 4
          %s958 = scalar_lea.vmem %s8, %s957
        $region72: #{decoder_layer.2} parent=59 // pred_fallthru
          _
      $region60: #{decoder_layer.2} parent=5 // pred_fallthru
        _
    $region6: #{decoder_layer.2} parent=1 // loop_footer
      %s25 = sadd.s32 1, %s21
    $region7: #{decoder_layer.2} parent=1 // loop_footer_branch
      %20 = sbr.rel target = $region3
    $region8: #{decoder_layer.2} parent=1 // loop_exit
      _
    %959 = vsyncpa [#allocation3], 1
    %s960 = scalar_lea.sflag [#allocation3], 1
    %961 = vsyncpa %s960, 1
    %962 = vsyncpa [#allocation5], 1
    %s963 = scalar_lea.sflag [#allocation5], 1
    %964 = vsyncpa %s963, 1

// kernel: decoder_layer.3
$region0: #{decoder_layer.3}
  #allocation0 [shape = 'u32[]', space=smem, size = 0x4, offset = 0x4, fixed_abs, tag = 'smem constant byte address 0x4 - core index']
  #allocation1 [shape = 'u32[144,128]{1,0:T(1,128)}', space=vmem, size = 0x12000, scoped, tag = 'internal scratch']
  %s0 = inlined_call_operand.vmem [shape: bf16[16,32], index: 0, kind: input, shape index: {}]
  %s1 = inlined_call_operand.vmem [shape: f32[16,32], index: 1, kind: input, shape index: {}]
  %s2 = inlined_call_operand.vmem [shape: f32[16,1], index: 2, kind: input, shape index: {}]
  %s3 = inlined_call_operand.vmem [shape: bf16[32,32], index: 3, kind: input, shape index: {}]
  %s4 = inlined_call_operand.vmem [shape: f32[1,32], index: 4, kind: input, shape index: {}]
  %s5 = inlined_call_operand.vmem [shape: f32[1,32], index: 5, kind: input, shape index: {}]
  %s6 = inlined_call_operand.vmem [shape: f32[1,32], index: 6, kind: input, shape index: {}]
  %s7 = inlined_call_operand.vmem [shape: bf16[32,64], index: 7, kind: input, shape index: {}]
  %s8 = inlined_call_operand.vmem [shape: f32[1,64], index: 8, kind: input, shape index: {}]
  %s9 = inlined_call_operand.vmem [shape: bf16[64,32], index: 9, kind: input, shape index: {}]
  %s10 = inlined_call_operand.vmem [shape: f32[1,32], index: 10, kind: input, shape index: {}]
  %s11 = inlined_call_operand.vmem [shape: f32[1,32], index: 11, kind: input, shape index: {}]
  %s12 = inlined_call_operand.vmem [shape: f32[1,32], index: 12, kind: input, shape index: {}]
  %s13 = inlined_call_operand.hbm [shape: f32[16,32], index: 13, kind: output, shape index: {}]
  %s14 = sld [smem:[#allocation0]]
  $region62: #{decoder_layer.3} parent=0
    _
  %s16 = ssub.s32 1, %s14
  %s17 = scalar_select 0, %s16, %s14
  $region1: #{decoder_layer.3} parent=0
    #allocation2 [shape = 'u8[8192]{0}', space=vmem, size = 0x2000, scoped, tag = 'output window, operand 0, single buffered']
    #allocation3 [shape = 's32[1]{0}', space=sflag, size = 0x4, scoped, tag = 'scoped memory for decoder_layer.3']
    %18 = vsyncpa [#allocation3], 0
    // Predicated region
    $region2: #{decoder_layer.3} parent=1 // pred_check
      _
    $region3: #{decoder_layer.3} parent=1 // pred_check_branch
      %20 = sbr.rel (0) target = $region5
    $region4: #{decoder_layer.3} parent=1 // pred_region
      _
    $region5: #{decoder_layer.3} parent=1 // pred_fallthru
      _
    // Predicated region
    $region6: #{decoder_layer.3} parent=1 // pred_check
      _
    $region7: #{decoder_layer.3} parent=1 // pred_check_branch
      %22 = sbr.rel (0) target = $region9
    $region8: #{decoder_layer.3} parent=1 // pred_region
      _
    $region9: #{decoder_layer.3} parent=1 // pred_fallthru
      _
    // Predicated region
    $region10: #{decoder_layer.3} parent=1 // pred_check
      _
    $region11: #{decoder_layer.3} parent=1 // pred_check_branch
      %24 = sbr.rel (0) target = $region13
    $region12: #{decoder_layer.3} parent=1 // pred_region
      _
    $region13: #{decoder_layer.3} parent=1 // pred_fallthru
      _
    // Predicated region
    $region14: #{decoder_layer.3} parent=1 // pred_check
      _
    $region15: #{decoder_layer.3} parent=1 // pred_check_branch
      %26 = sbr.rel (0) target = $region17
    $region16: #{decoder_layer.3} parent=1 // pred_region
      _
    $region17: #{decoder_layer.3} parent=1 // pred_fallthru
      _
    // Predicated region
    $region18: #{decoder_layer.3} parent=1 // pred_check
      _
    $region19: #{decoder_layer.3} parent=1 // pred_check_branch
      %28 = sbr.rel (0) target = $region21
    $region20: #{decoder_layer.3} parent=1 // pred_region
      _
    $region21: #{decoder_layer.3} parent=1 // pred_fallthru
      _
    // Predicated region
    $region22: #{decoder_layer.3} parent=1 // pred_check
      _
    $region23: #{decoder_layer.3} parent=1 // pred_check_branch
      %30 = sbr.rel (0) target = $region25
    $region24: #{decoder_layer.3} parent=1 // pred_region
      _
    $region25: #{decoder_layer.3} parent=1 // pred_fallthru
      _
    // Predicated region
    $region26: #{decoder_layer.3} parent=1 // pred_check
      _
    $region27: #{decoder_layer.3} parent=1 // pred_check_branch
      %32 = sbr.rel (0) target = $region29
    $region28: #{decoder_layer.3} parent=1 // pred_region
      _
    $region29: #{decoder_layer.3} parent=1 // pred_fallthru
      _
    // Predicated region
    $region30: #{decoder_layer.3} parent=1 // pred_check
      _
    $region31: #{decoder_layer.3} parent=1 // pred_check_branch
      %34 = sbr.rel (0) target = $region33
    $region32: #{decoder_layer.3} parent=1 // pred_region
      _
    $region33: #{decoder_layer.3} parent=1 // pred_fallthru
      _
    // Predicated region
    $region34: #{decoder_layer.3} parent=1 // pred_check
      _
    $region35: #{decoder_layer.3} parent=1 // pred_check_branch
      %36 = sbr.rel (0) target = $region37
    $region36: #{decoder_layer.3} parent=1 // pred_region
      _
    $region37: #{decoder_layer.3} parent=1 // pred_fallthru
      _
    // Predicated region
    $region38: #{decoder_layer.3} parent=1 // pred_check
      _
    $region39: #{decoder_layer.3} parent=1 // pred_check_branch
      %38 = sbr.rel (0) target = $region41
    $region40: #{decoder_layer.3} parent=1 // pred_region
      _
    $region41: #{decoder_layer.3} parent=1 // pred_fallthru
      _
    // Predicated region
    $region42: #{decoder_layer.3} parent=1 // pred_check
      _
    $region43: #{decoder_layer.3} parent=1 // pred_check_branch
      %40 = sbr.rel (0) target = $region45
    $region44: #{decoder_layer.3} parent=1 // pred_region
      _
    $region45: #{decoder_layer.3} parent=1 // pred_fallthru
      _
    // Predicated region
    $region46: #{decoder_layer.3} parent=1 // pred_check
      _
    $region47: #{decoder_layer.3} parent=1 // pred_check_branch
      %42 = sbr.rel (0) target = $region49
    $region48: #{decoder_layer.3} parent=1 // pred_region
      _
    $region49: #{decoder_layer.3} parent=1 // pred_fallthru
      _
    // Predicated region
    $region50: #{decoder_layer.3} parent=1 // pred_check
      _
    $region51: #{decoder_layer.3} parent=1 // pred_check_branch
      %44 = sbr.rel (0) target = $region53
    $region52: #{decoder_layer.3} parent=1 // pred_region
      _
    $region53: #{decoder_layer.3} parent=1 // pred_fallthru
      _
    %v46 = vld [vmem:[%s0] sm:$0xf]
    %v47 = vld [vmem:[%s0 + $0x4] sm:$0xf]
    %v48 = vld [vmem:[%s2] sm:$0xff]
    %v49 = vld [vmem:[%s2 + $0x8] sm:$0xff]
    %v50 = vld [vmem:[%s3] sm:$0xf]
    %v51 = vld [vmem:[%s3 + $0x4] sm:$0xf]
    %v52 = vld [vmem:[%s3 + $0x8] sm:$0xf]
    %v53 = vld [vmem:[%s3 + $0xc] sm:$0xf]
    %v54 = vld [vmem:[%s4] sm:$0x1]
    %v56 = vlaneseq
    %v57 = vshrl.u32 %v56, 7
    %v58 = vsub.s32 0, %v57
    %v59 = vrot.slane %v54, %v58
    %v63 = vunpack.c.l.b16 %v46
    %v64 = vunpack.c.l.b16 %v47
    %v65 = vpack.c.b16 %v64, %v63
    %v70 = vunpack.c.l.b16 %v50
    %v71 = vunpack.c.l.b16 %v51
    %v72 = vunpack.c.l.b16 %v52
    %v73 = vunpack.c.l.b16 %v53
    %v74 = vpack.c.b16 %v71, %v70
    %v75 = vpack.c.b16 %v73, %v72
    %vm78 = vcmask 261120
    %v80 = vsel %vm78, %v65, 0
    %82 = vmatprep.subr.bf16.mxu0 0
    %83 = vmatpush1.bf16.msra.mxu0 %v74
    %84 = vmatprep.subr.bf16.mxu0 0
    %85 = vmatpush1.bf16.msra.mxu0 %v75
    %86 = vmatprep.subr.bf16.mxu0 0
    %87 = vmatpush1.bf16.msra.mxu0 0
    %88 = vmatprep.subr.bf16.mxu0 0
    %89 = vmatpush1.bf16.msra.mxu0 0
    %90 = vmatprep.subr.bf16.mxu0 0
    %91 = vmatpush1.bf16.msra.mxu0 0
    %92 = vmatprep.subr.bf16.mxu0 0
    %93 = vmatpush1.bf16.msra.mxu0 0
    %94 = vmatprep.subr.bf16.mxu0 0
    %95 = vmatpush1.bf16.msra.mxu0 0
    %96 = vmatprep.subr.bf16.mxu0 0
    %97 = vmatpush1.bf16.msra.mxu0 0
    %98 = vmatprep.subr.bf16.mxu0 0
    %99 = vmatpush1.bf16.msra.mxu0 0
    %100 = vmatprep.subr.bf16.mxu0 0
    %101 = vmatpush1.bf16.msra.mxu0 0
    %102 = vmatprep.subr.bf16.mxu0 0
    %103 = vmatpush1.bf16.msra.mxu0 0
    %104 = vmatprep.subr.bf16.mxu0 0
    %105 = vmatpush1.bf16.msra.mxu0 0
    %106 = vmatprep.subr.bf16.mxu0 0
    %107 = vmatpush1.bf16.msra.mxu0 0
    %108 = vmatprep.subr.bf16.mxu0 0
    %109 = vmatpush1.bf16.msra.mxu0 0
    %110 = vmatprep.subr.bf16.mxu0 0
    %111 = vmatpush1.bf16.msra.mxu0 0
    %112 = vmatprep.subr.bf16.mxu0 0
    %113 = vmatpush1.bf16.msra.mxu0 0
    %114 = vmatprep.mubr.bf16.mxu0 0
    %115 = vmatmul.mubr.bf16.gmra.mrb[0].mxu0 %v80
    %v116 = vpop.f32.mrb[0].mxu0
    %v117 = vadd.f32 %v59, %v116
    %v118 = vpop.f32.mrb[0].mxu0
    %v119 = vpop.f32.mrb[0].mxu0
    %v120 = vadd.f32 %v59, %v119
    %v121 = vpop.f32.mrb[0].mxu0
    %122 = vdwg.mxu0
    %v123 = vld [vmem:[%s1] sm:$0xff]
    %v124 = vld [vmem:[%s1 + $0x8] sm:$0xff]
    %v125 = vadd.f32 %v117, %v123
    %v126 = vadd.f32 %v120, %v124
    %v127 = vld [vmem:[%s5] sm:$0x1]
    %v128 = vld [vmem:[%s6] sm:$0x1]
    %v129 = vsel %vm78, %v125, 0.0
    %130 = vadd.xlane.f32.xlu0 %v129
    %v131 = vpop.xlane.xlu0 %130
    %v132 = vsel %vm78, %v126, 0.0
    %133 = vadd.xlane.f32.xlu0 %v132
    %v134 = vpop.xlane.xlu0 %133
    %v135 = vrcp.pop 32.0
    %v136 = vmul.f32 %v131, %v135
    %v137 = vmul.f32 %v134, %v135
    %v138 = vsub.f32 %v125, %v136
    %v139 = vsub.f32 %v126, %v137
    %v140 = vmul.f32 %v138, %v138
    %v141 = vmul.f32 %v139, %v139
    %v142 = vsel %vm78, %v140, 0.0
    %143 = vadd.xlane.f32.xlu0 %v142
    %v144 = vpop.xlane.xlu0 %143
    %v145 = vsel %vm78, %v141, 0.0
    %146 = vadd.xlane.f32.xlu0 %v145
    %v147 = vpop.xlane.xlu0 %146
    %v148 = vmul.f32 %v144, %v135
    %v149 = vmul.f32 %v147, %v135
    %v150 = vadd.f32 %v148, 1e-05
    %v151 = vadd.f32 %v149, 1e-05
    %v152 = vrsqrt.pop %v150
    %v153 = vrsqrt.pop %v151
    %v154 = vmul.f32 %v138, %v152
    %v155 = vmul.f32 %v139, %v153
    %v157 = vlaneseq
    %v158 = vshrl.u32 %v157, 7
    %v159 = vsub.s32 0, %v158
    %v160 = vrot.slane %v127, %v159
    %v162 = vmul.f32 %v154, %v160
    %v163 = vmul.f32 %v155, %v160
    %v165 = vlaneseq
    %v166 = vshrl.u32 %v165, 7
    %v167 = vsub.s32 0, %v166
    %v168 = vrot.slane %v128, %v167
    %v170 = vadd.f32 %v162, %v168
    %v171 = vadd.f32 %v163, %v168
    %173 = vset.pattern.permute.xlu0 0
    %174 = vperm.xlu0 %173, %v48
    %v175 = vpop.permute.xlu0 %174
    %178 = vset.pattern.permute.xlu0 0
    %179 = vperm.xlu0 %178, %v49
    %v180 = vpop.permute.xlu0 %179
    %v182 = vmul.f32 %v170, %v175
    %v183 = vmul.f32 %v171, %v180
    %v184 = vpack.c.bf16 %v183, %v182
    %v185 = vld [vmem:[%s7] sm:$0xf]
    %v186 = vld [vmem:[%s7 + $0x4] sm:$0xf]
    %v187 = vld [vmem:[%s7 + $0x8] sm:$0xf]
    %v188 = vld [vmem:[%s7 + $0xc] sm:$0xf]
    %v189 = vld [vmem:[%s8] sm:$0x1]
    %v191 = vlaneseq
    %v192 = vshrl.u32 %v191, 7
    %v193 = vsub.s32 0, %v192
    %v194 = vrot.slane %v189, %v193
    %v200 = vunpack.c.l.b16 %v185
    %v201 = vunpack.c.l.b16 %v186
    %v202 = vunpack.c.l.b16 %v187
    %v203 = vunpack.c.l.b16 %v188
    %v204 = vpack.c.b16 %v201, %v200
    %v205 = vpack.c.b16 %v203, %v202
    %v209 = vsel %vm78, %v184, 0
    %211 = vmatprep.subr.bf16.mxu0 0
    %212 = vmatpush1.bf16.msra.mxu0 %v204
    %213 = vmatprep.subr.bf16.mxu0 0
    %214 = vmatpush1.bf16.msra.mxu0 %v205
    %215 = vmatprep.subr.bf16.mxu0 0
    %216 = vmatpush1.bf16.msra.mxu0 0
    %217 = vmatprep.subr.bf16.mxu0 0
    %218 = vmatpush1.bf16.msra.mxu0 0
    %219 = vmatprep.subr.bf16.mxu0 0
    %220 = vmatpush1.bf16.msra.mxu0 0
    %221 = vmatprep.subr.bf16.mxu0 0
    %222 = vmatpush1.bf16.msra.mxu0 0
    %223 = vmatprep.subr.bf16.mxu0 0
    %224 = vmatpush1.bf16.msra.mxu0 0
    %225 = vmatprep.subr.bf16.mxu0 0
    %226 = vmatpush1.bf16.msra.mxu0 0
    %227 = vmatprep.subr.bf16.mxu0 0
    %228 = vmatpush1.bf16.msra.mxu0 0
    %229 = vmatprep.subr.bf16.mxu0 0
    %230 = vmatpush1.bf16.msra.mxu0 0
    %231 = vmatprep.subr.bf16.mxu0 0
    %232 = vmatpush1.bf16.msra.mxu0 0
    %233 = vmatprep.subr.bf16.mxu0 0
    %234 = vmatpush1.bf16.msra.mxu0 0
    %235 = vmatprep.subr.bf16.mxu0 0
    %236 = vmatpush1.bf16.msra.mxu0 0
    %237 = vmatprep.subr.bf16.mxu0 0
    %238 = vmatpush1.bf16.msra.mxu0 0
    %239 = vmatprep.subr.bf16.mxu0 0
    %240 = vmatpush1.bf16.msra.mxu0 0
    %241 = vmatprep.subr.bf16.mxu0 0
    %242 = vmatpush1.bf16.msra.mxu0 0
    %243 = vmatprep.mubr.bf16.mxu0 0
    %244 = vmatmul.mubr.bf16.gmra.mrb[0].mxu0 %v209
    %v245 = vpop.f32.mrb[0].mxu0
    %v246 = vadd.f32 %v194, %v245
    %v247 = vpop.f32.mrb[0].mxu0
    %v248 = vpop.f32.mrb[0].mxu0
    %v249 = vadd.f32 %v194, %v248
    %v250 = vpop.f32.mrb[0].mxu0
    %251 = vdwg.mxu0
    %v252 = vmax.f32 %v246, 0.0
    %v253 = vmax.f32 %v249, 0.0
    %v254 = vpack.c.bf16 %v253, %v252
    %v255 = vld [vmem:[%s9] sm:$0xf]
    %v256 = vld [vmem:[%s9 + $0x4] sm:$0xf]
    %v257 = vld [vmem:[%s9 + $0x8] sm:$0xf]
    %v258 = vld [vmem:[%s9 + $0xc] sm:$0xf]
    %v259 = vld [vmem:[%s9 + $0x10] sm:$0xf]
    %v260 = vld [vmem:[%s9 + $0x14] sm:$0xf]
    %v261 = vld [vmem:[%s9 + $0x18] sm:$0xf]
    %v262 = vld [vmem:[%s9 + $0x1c] sm:$0xf]
    %v263 = vld [vmem:[%s10] sm:$0x1]
    %v265 = vlaneseq
    %v266 = vshrl.u32 %v265, 7
    %v267 = vsub.s32 0, %v266
    %v268 = vrot.slane %v263, %v267
    %v278 = vunpack.c.l.b16 %v255
    %v279 = vunpack.c.l.b16 %v256
    %v280 = vunpack.c.l.b16 %v257
    %v281 = vunpack.c.l.b16 %v258
    %v282 = vunpack.c.l.b16 %v259
    %v283 = vunpack.c.l.b16 %v260
    %v284 = vunpack.c.l.b16 %v261
    %v285 = vunpack.c.l.b16 %v262
    %v286 = vpack.c.b16 %v279, %v278
    %v287 = vpack.c.b16 %v281, %v280
    %v288 = vpack.c.b16 %v283, %v282
    %v289 = vpack.c.b16 %v285, %v284
    %vm294 = vcmask 523264
    %v296 = vsel %vm294, %v254, 0
    %298 = vmatprep.subr.bf16.mxu0 0
    %299 = vmatpush1.bf16.msra.mxu0 %v286
    %300 = vmatprep.subr.bf16.mxu0 0
    %301 = vmatpush1.bf16.msra.mxu0 %v287
    %302 = vmatprep.subr.bf16.mxu0 0
    %303 = vmatpush1.bf16.msra.mxu0 %v288
    %304 = vmatprep.subr.bf16.mxu0 0
    %305 = vmatpush1.bf16.msra.mxu0 %v289
    %306 = vmatprep.subr.bf16.mxu0 0
    %307 = vmatpush1.bf16.msra.mxu0 0
    %308 = vmatprep.subr.bf16.mxu0 0
    %309 = vmatpush1.bf16.msra.mxu0 0
    %310 = vmatprep.subr.bf16.mxu0 0
    %311 = vmatpush1.bf16.msra.mxu0 0
    %312 = vmatprep.subr.bf16.mxu0 0
    %313 = vmatpush1.bf16.msra.mxu0 0
    %314 = vmatprep.subr.bf16.mxu0 0
    %315 = vmatpush1.bf16.msra.mxu0 0
    %316 = vmatprep.subr.bf16.mxu0 0
    %317 = vmatpush1.bf16.msra.mxu0 0
    %318 = vmatprep.subr.bf16.mxu0 0
    %319 = vmatpush1.bf16.msra.mxu0 0
    %320 = vmatprep.subr.bf16.mxu0 0
    %321 = vmatpush1.bf16.msra.mxu0 0
    %322 = vmatprep.subr.bf16.mxu0 0
    %323 = vmatpush1.bf16.msra.mxu0 0
    %324 = vmatprep.subr.bf16.mxu0 0
    %325 = vmatpush1.bf16.msra.mxu0 0
    %326 = vmatprep.subr.bf16.mxu0 0
    %327 = vmatpush1.bf16.msra.mxu0 0
    %328 = vmatprep.subr.bf16.mxu0 0
    %329 = vmatpush1.bf16.msra.mxu0 0
    %330 = vmatprep.mubr.bf16.mxu0 0
    %331 = vmatmul.mubr.bf16.gmra.mrb[0].mxu0 %v296
    %v332 = vpop.f32.mrb[0].mxu0
    %v333 = vadd.f32 %v268, %v332
    %v334 = vpop.f32.mrb[0].mxu0
    %v335 = vpop.f32.mrb[0].mxu0
    %v336 = vadd.f32 %v268, %v335
    %v337 = vpop.f32.mrb[0].mxu0
    %338 = vdwg.mxu0
    %v339 = vadd.f32 %v333, %v182
    %v340 = vadd.f32 %v336, %v183
    %v341 = vld [vmem:[%s11] sm:$0x1]
    %v342 = vld [vmem:[%s12] sm:$0x1]
    %v343 = vsel %vm78, %v339, 0.0
    %344 = vadd.xlane.f32.xlu0 %v343
    %v345 = vpop.xlane.xlu0 %344
    %v346 = vsel %vm78, %v340, 0.0
    %347 = vadd.xlane.f32.xlu0 %v346
    %v348 = vpop.xlane.xlu0 %347
    %v349 = vmul.f32 %v345, %v135
    %v350 = vmul.f32 %v348, %v135
    %v351 = vsub.f32 %v339, %v349
    %v352 = vsub.f32 %v340, %v350
    %v353 = vmul.f32 %v351, %v351
    %v354 = vmul.f32 %v352, %v352
    %v355 = vsel %vm78, %v353, 0.0
    %356 = vadd.xlane.f32.xlu0 %v355
    %v357 = vpop.xlane.xlu0 %356
    %v358 = vsel %vm78, %v354, 0.0
    %359 = vadd.xlane.f32.xlu0 %v358
    %v360 = vpop.xlane.xlu0 %359
    %v361 = vmul.f32 %v357, %v135
    %v362 = vmul.f32 %v360, %v135
    %v363 = vadd.f32 %v361, 1e-05
    %v364 = vadd.f32 %v362, 1e-05
    %v365 = vrsqrt.pop %v363
    %v366 = vrsqrt.pop %v364
    %v367 = vmul.f32 %v351, %v365
    %v368 = vmul.f32 %v352, %v366
    %v370 = vlaneseq
    %v371 = vshrl.u32 %v370, 7
    %v372 = vsub.s32 0, %v371
    %v373 = vrot.slane %v341, %v372
    %v375 = vmul.f32 %v367, %v373
    %v376 = vmul.f32 %v368, %v373
    %v378 = vlaneseq
    %v379 = vshrl.u32 %v378, 7
    %v380 = vsub.s32 0, %v379
    %v381 = vrot.slane %v342, %v380
    %v383 = vadd.f32 %v375, %v381
    %v384 = vadd.f32 %v376, %v381
    %v385 = vmul.f32 %v383, %v175
    %v386 = vmul.f32 %v384, %v180
    %387 = vst.msk [vmem:[#allocation2] sm:$0xff] %vm78, %v385
    %388 = vst.msk [vmem:[#allocation2 + $0x8] sm:$0xff] %vm78, %v386
    // Predicated region
    $region54: #{decoder_layer.3} parent=1 // pred_check
      _
    $region55: #{decoder_layer.3} parent=1 // pred_check_branch
      %390 = sbr.rel (0) target = $region57
    $region56: #{decoder_layer.3} parent=1 // pred_region
      %s392 = ssub.s32 256, 256
      %393 = vsyncadd [#allocation3], %s392
      %s394 = sshll.u32 [#allocation2], 4
      %s395 = int_to_ptr.vmem [resolvable:$true] %s394
      %400 = dma.vmem_to_hbm [thread:$0]  %s395, 256, %s13, [#allocation3], 128, 128, 8
    $region57: #{decoder_layer.3} parent=1 // pred_fallthru
      _
    // Predicated region
    $region58: #{decoder_layer.3} parent=1 // pred_check
      _
    $region59: #{decoder_layer.3} parent=1 // pred_check_branch
      %402 = sbr.rel (0) target = $region61
    $region60: #{decoder_layer.3} parent=1 // pred_region
      %403 = dma.done [#allocation3], 256
    $region61: #{decoder_layer.3} parent=1 // pred_fallthru
      _
    %404 = vsyncpa [#allocation3], 1

</llo_original>
